<compile_context>
chip_gen: v7x
topology: tpu7x:2x2x1
jax: 0.10.0
libtpu: 0.0.40
codegen_flags: <defaults>
</compile_context>

<pallas_src>
import functools

import numpy as np
import jax
import jax.numpy as jnp
from jax.experimental import pallas as pl
from jax.experimental.pallas import tpu as pltpu


# ----------------------------------------------------------------------------
# Pallas kernel: fused bilinear sample + masked multi-view accumulate
# ----------------------------------------------------------------------------
def _project_kernel(coords_ref, heat_ref, out_ref, *, C, H, W, N, feature_op):
    tile_n = out_ref.shape[-1]

    # View-invariant constants, hoisted out of the per-view loop.  Keep the
    # one-hot equality compares in f32 (exact for H, W < 2^24).
    row_w = jax.lax.broadcasted_iota(jnp.int32, (W, tile_n), 0).astype(jnp.float32)
    row_h = jax.lax.broadcasted_iota(jnp.int32, (H, tile_n), 0).astype(jnp.float32)

    acc = jnp.zeros((C, tile_n), jnp.float32)
    for v in range(N):                                 # N small & static -> unroll
        crd = coords_ref[0, v]                         # (3, tile_n) f32
        px, py, bd = crd[0:1, :], crd[1:2, :], crd[2:3, :]

        x0 = jnp.floor(px)
        fx = px - x0
        y0 = jnp.floor(py)
        fy = py - y0

        # One-hot bilinear weights, lane-dense over voxels.
        wx = (jnp.where(row_w == x0, 1.0 - fx, 0.0)
              + jnp.where(row_w == x0 + 1.0, fx, 0.0))          # (W, tile_n)
        wy = (jnp.where(row_h == y0, 1.0 - fy, 0.0)
              + jnp.where(row_h == y0 + 1.0, fy, 0.0))          # (H, tile_n)

        heat_v = heat_ref[0, v]                                  # (C*H, W) bf16
        # stage 1: gather+lerp over W on the MXU (bf16 operands) -> (C*H, tile_n)
        s1 = jnp.dot(heat_v, wx.astype(heat_v.dtype),
                     preferred_element_type=jnp.float32)
        # stage 2: lerp over H as a sublane (XLU) reduction -> (C, tile_n).
        # s1 row index is c*H + h, so the reshape is a pure view split.
        val = jnp.sum(s1.reshape(C, H, tile_n) * wy[None], axis=1)

        acc = acc + val * bd          # bd already carries bound/(den+1e-6)

    if not feature_op:
        acc = jnp.clip(acc, 0.0, 1.0)
    out_ref[0] = acc.astype(out_ref.dtype)


def project_voxel_pallas(heat_r, coords, *, C, H, W, feature_op=False, tile_n=512):
    """heat_r: (B, N, C*H, W) bf16; coords: (B, N, 3, nbins) f32 -> (B, C, nbins)."""
    B, N, CH, _ = heat_r.shape
    nbins = coords.shape[-1]

    lane = 128
    tile_n = min(tile_n, pl.cdiv(nbins, lane) * lane)
    nbins_pad = pl.cdiv(nbins, tile_n) * tile_n
    if nbins_pad != nbins:
        # padded voxels get bound weight 0 -> output 0, sliced off afterwards
        coords = jnp.pad(coords, ((0, 0), (0, 0), (0, 0), (0, nbins_pad - nbins)))
    n_tiles = nbins_pad // tile_n

    # VMEM budget sized from the actual blocks + per-view in-kernel temporaries,
    # clamped to [32 MiB, 64 MiB] so it is valid on v5e/v6e (128 MiB) and v7x (64 MiB).
    vmem_est = int(
        2 * N * CH * W * heat_r.dtype.itemsize          # double-buffered heat block
        + 2 * N * 3 * tile_n * 4                        # double-buffered coords block
        + 2 * C * tile_n * 4                            # double-buffered output block
        + (CH + W + 2 * H + 4 * C) * tile_n * 4         # per-view live temporaries
        + (4 << 20))                                    # compiler slack
    vmem_limit = min(max(vmem_est, 32 << 20), 64 << 20)

    # NOTE: heat's block index is constant across the inner t axis, so Pallas
    # skips its re-DMA on revisit; pipeline_mode=pl.Buffered(1) on that spec
    # would additionally drop the second pipeline buffer (worth it on v7x at
    # production shapes).

    kernel = functools.partial(_project_kernel, C=C, H=H, W=W, N=N,
                               feature_op=feature_op)
    out = pl.pallas_call(
        kernel,
        out_shape=jax.ShapeDtypeStruct((B, C, nbins_pad), jnp.float32),
        grid_spec=pltpu.PrefetchScalarGridSpec(
            num_scalar_prefetch=0,
            grid=(B, n_tiles),
            in_specs=[
                pl.BlockSpec((1, N, 3, tile_n), lambda b, t: (b, 0, 0, t)),
                pl.BlockSpec((1, N, CH, W), lambda b, t: (b, 0, 0, 0)),
            ],
            out_specs=pl.BlockSpec((1, C, tile_n), lambda b, t: (b, 0, t)),
        ),
        compiler_params=pltpu.CompilerParams(
            dimension_semantics=("parallel", "parallel"),
            vmem_limit_bytes=vmem_limit),
    )(coords, heat_r)
    return out[:, :, :nbins]


# ----------------------------------------------------------------------------
# Plain-JAX glue (grid construction, camera projection, affine transforms)
# ----------------------------------------------------------------------------
def compute_grid(box_size, box_center, n_bins):
    gx = jnp.linspace(-box_size[0] / 2, box_size[0] / 2, n_bins[0]) + box_center[0]
    gy = jnp.linspace(-box_size[1] / 2, box_size[1] / 2, n_bins[1]) + box_center[1]
    gz = jnp.linspace(-box_size[2] / 2, box_size[2] / 2, n_bins[2]) + box_center[2]
    X, Y, Z = jnp.meshgrid(gx, gy, gz, indexing="ij")
    return jnp.stack([X.ravel(), Y.ravel(), Z.ravel()], axis=1).astype(jnp.float32)


def project_pose(x, cam):
    """Pinhole + radial/tangential distortion (voxelpose cameras.project_pose)."""
    R, T, f, c, k, p = cam["R"], cam["T"], cam["f"], cam["c"], cam["k"], cam["p"]
    xcam = R @ (x - T.reshape(1, 3)).T                   # (3, n)
    y = xcam[:2] / (xcam[2:3] + 1e-5)                    # (2, n)
    r2 = jnp.sum(y * y, axis=0)
    radial = 1.0 + k[0] * r2 + k[1] * r2 ** 2 + k[2] * r2 ** 3
    tan = p[0] * y[1] + p[1] * y[0]
    yd = y * (radial + 2.0 * tan)[None, :] + jnp.outer(jnp.array([p[1], p[0]]), r2)
    ypixel = f.reshape(2, 1) * yd + c.reshape(2, 1)
    return ypixel.T                                      # (n, 2)


def compute_sample_coords(grid, cams, centers, scales, img_size, H, W):
    """Vectorized over (views, batch).  Returns px, py, bound each (B, N, nbins)."""
    N = len(cams)

    cam_stack = {key: jnp.stack([jnp.asarray(cams[v][key], jnp.float32)
                                 for v in range(N)])
                 for key in ("R", "T", "f", "c", "k", "p")}
    xy = jax.vmap(lambda cam: project_pose(grid, cam))(cam_stack)   # (N, nbins, 2)

    centers = jnp.asarray(centers, jnp.float32)          # (N, B, 2)
    scales = jnp.asarray(scales, jnp.float32)            # (N, B, 2)
    width = centers[..., 0:1] * 2.0                      # (N, B, 1)
    height = centers[..., 1:2] * 2.0

    xy_b = xy[:, None]                                   # (N, 1, nbins, 2)
    bound = ((xy_b[..., 0] >= 0) & (xy_b[..., 1] >= 0) &
             (xy_b[..., 0] < width) & (xy_b[..., 1] < height)
             ).astype(jnp.float32)                       # (N, B, nbins)

    ub = jnp.maximum(width, height)[..., None]           # (N, B, 1, 1)
    xy_c = jnp.clip(xy_b, -1.0, ub)                      # (N, B, nbins, 2)

    # rot == 0 path of get_transform + do_transform, fully vectorized.
    hsz = 200.0 * scales                                 # (N, B, 2)
    out_w, out_h = float(img_size[0]), float(img_size[1])
    t00 = out_w / hsz[..., 0:1]
    t11 = out_h / hsz[..., 1:2]
    t02 = out_w * (-centers[..., 0:1] / hsz[..., 0:1] + 0.5)
    t12 = out_h * (-centers[..., 1:2] / hsz[..., 1:2] + 0.5)
    xt = xy_c[..., 0] * t00 + t02                        # (N, B, nbins)
    yt = xy_c[..., 1] * t11 + t12

    w_hm, h_hm = float(W), float(H)                      # heatmap_size = img/2
    xt = xt * w_hm / float(img_size[0])
    yt = yt * h_hm / float(img_size[1])
    sgx = jnp.clip(xt / (w_hm - 1.0) * 2.0 - 1.0, -1.1, 1.1)
    sgy = jnp.clip(yt / (h_hm - 1.0) * 2.0 - 1.0, -1.1, 1.1)
    # align_corners=True pixel coordinates
    px = (sgx + 1.0) * 0.5 * (W - 1)
    py = (sgy + 1.0) * 0.5 * (H - 1)

    to_bn = lambda a: jnp.transpose(a, (1, 0, 2))        # (N,B,nbins)->(B,N,nbins)
    return to_bn(px), to_bn(py), to_bn(bound)


def project_layer_forward(heatmaps, cams, centers, scales, img_size,
                          grid_size, grid_center, cube_size, feature_op=False):
    """heatmaps: (N, B, C, H, W).  Returns (cubes (B,C,cx,cy,cz), grids (B,nbins,3))."""
    N, B, C, H, W = heatmaps.shape
    nbins = cube_size[0] * cube_size[1] * cube_size[2]

    grid = compute_grid(grid_size, grid_center, cube_size)          # (nbins, 3)
    grids = jnp.broadcast_to(grid[None], (B, nbins, 3))
    # TODO(synk): 4-element grid_center (per-sample validity flag) skip path not modeled.

    px, py, bound = compute_sample_coords(grid, cams, centers, scales,
                                          img_size, H, W)           # (B, N, nbins)
    den = jnp.sum(bound, axis=1, keepdims=True)                     # (B, 1, nbins)
    bd_scaled = bound / (den + 1e-6)        # fold multi-view normalization in
    coords = jnp.stack([px, py, bd_scaled], axis=2).astype(jnp.float32)  # (B,N,3,nbins)

    # (N,B,C,H,W) -> (B,N,C*H,W): leading-axis swap + reshape (no inner transpose)
    heat_r = jnp.transpose(heatmaps, (1, 0, 2, 3, 4)).reshape(B, N, C * H, W)
    heat_r = heat_r.astype(jnp.bfloat16)

    out = project_voxel_pallas(heat_r, coords, C=C, H=H, W=W,
                               feature_op=feature_op)               # (B, C, nbins)
    cubes = out.reshape(B, C, cube_size[0], cube_size[1], cube_size[2])
    return cubes, grids


# ----------------------------------------------------------------------------
# numpy reference (direct gather bilinear, zeros padding) for verification
# ----------------------------------------------------------------------------
def reference_cubes(heatmaps, coords, cube_size, feature_op=False):
    heat = np.asarray(heatmaps)
    coords = np.asarray(coords)
    N, B, C, H, W = heat.shape
    nbins = coords.shape[2]
    num = np.zeros((B, C, nbins), np.float32)
    den = np.zeros((B, 1, nbins), np.float32)
    for b in range(B):
        for v in range(N):
            px, py, bd = coords[b, v, :, 0], coords[b, v, :, 1], coords[b, v, :, 2]
            x0 = np.floor(px).astype(np.int32)
            y0 = np.floor(py).astype(np.int32)
            fx, fy = px - x0, py - y0
            val = np.zeros((C, nbins), np.float32)
            for yy, xx, wgt in [(y0, x0, (1 - fy) * (1 - fx)),
                                (y0, x0 + 1, (1 - fy) * fx),
                                (y0 + 1, x0, fy * (1 - fx)),
                                (y0 + 1, x0 + 1, fy * fx)]:
                valid = (xx >= 0) & (xx < W) & (yy >= 0) & (yy < H)
                xc = np.clip(xx, 0, W - 1)
                yc = np.clip(yy, 0, H - 1)
                samp = heat[v, b][:, yc, xc]
                val += np.where(valid[None], samp, 0.0) * wgt[None]
            num[b] += val * bd[None]
            den[b] += bd[None]
    res = num / (den + 1e-6)
    res = np.nan_to_num(res)
    if not feature_op:
        res = np.clip(res, 0.0, 1.0)
    return res.reshape(B, C, *cube_size)


# ----------------------------------------------------------------------------
if __name__ == "__main__":
    key = jax.random.PRNGKey(0)

    B, C, N = 2, 4, 2                 # batch, heatmap channels (joints), camera views
    img_size = (32, 32)               # cfg.NETWORK.IMAGE_SIZE
    H = W = img_size[0] // 2          # heatmap size = image_size / 2
    cube_size = (8, 8, 8)             # cfg.MULTI_PERSON.INITIAL_CUBE_SIZE
    grid_size = (2000.0, 2000.0, 2000.0)
    grid_center = (0.0, 0.0, 1000.0)
    feature_op = False

    heatmaps = jax.random.uniform(key, (N, B, C, H, W), dtype=jnp.float32)

    # Deterministic synthetic cameras (two views looking at the space center).
    cams = [
        dict(R=jnp.array([[1., 0., 0.], [0., 0., -1.], [0., 1., 0.]], jnp.float32),
             T=jnp.array([0., -4000., 1000.], jnp.float32),
             f=jnp.array([60., 60.], jnp.float32),
             c=jnp.array([32., 32.], jnp.float32),
             k=jnp.array([0.01, 0.001, 0.0001], jnp.float32),
             p=jnp.array([0.001, 0.002], jnp.float32)),
        dict(R=jnp.array([[0., 1., 0.], [0., 0., 1.], [1., 0., 0.]], jnp.float32),
             T=jnp.array([-4000., 0., 1000.], jnp.float32),
             f=jnp.array([55., 55.], jnp.float32),
             c=jnp.array([32., 32.], jnp.float32),
             k=jnp.array([0.02, 0.0, 0.0], jnp.float32),
             p=jnp.array([0.0, 0.001], jnp.float32)),
    ]
    # meta: per-view, per-batch crop center/scale (original image is 64x64 here).
    centers = np.full((N, B, 2), 32.0, np.float32)
    scales = np.full((N, B, 2), 64.0 / 200.0, np.float32)

    cubes, grids = project_layer_forward(
        heatmaps, cams, centers, scales, img_size,
        grid_size, grid_center, cube_size, feature_op=feature_op)
    cubes, grids = jax.block_until_ready((cubes, grids))

    # Verify the kernel against a direct numpy bilinear-gather reference.
    nbins = cube_size[0] * cube_size[1] * cube_size[2]
    grid = compute_grid(grid_size, grid_center, cube_size)
    px, py, bound = compute_sample_coords(grid, cams, centers, scales,
                                          img_size, H, W)
    coords_chk = jnp.stack([px, py, bound], axis=-1)                 # (B, N, nbins, 3)

    ref = reference_cubes(heatmaps, coords_chk, cube_size, feature_op=feature_op)
    assert cubes.shape == (B, C, *cube_size)
    assert grids.shape == (B, nbins, 3)
    np.testing.assert_allclose(np.asarray(cubes), ref, atol=2e-2, rtol=2e-2)

    print("KERNEL_OK")
</pallas_src>

<mosaic_0001>
module attributes {stable_mosaic.version = 11 : i64} {
  func.func @_project_kernel(%arg0: i32, %arg1: i32, %arg2: memref<1x2x3x512xf32, #tpu.memory_space<vmem>>, %arg3: memref<1x2x64x16xbf16, #tpu.memory_space<vmem>>, %arg4: memref<1x4x512xf32, #tpu.memory_space<vmem>>) attributes {dimension_semantics = [#tpu.dimension_semantics<parallel>, #tpu.dimension_semantics<parallel>], iteration_bounds = array<i64: 2, 1>, scalar_prefetch = 0 : i64, scratch_operands = 0 : i64, tpu.core_type = #tpu.core_type<tc>, window_params = [{transform_indices = @transform_0, window_bounds = array<i64: 1, 2, 3, 512>}, {transform_indices = @transform_1, window_bounds = array<i64: 1, 2, 64, 16>}, {transform_indices = @transform_2, window_bounds = array<i64: 1, 4, 512>}]} {
    %0 = tpu.iota {dimensions = array<i32: 0>} : vector<16x512xi32>
    %1 = arith.sitofp %0 : vector<16x512xi32> to vector<16x512xf32>
    %2 = tpu.iota {dimensions = array<i32: 0>} : vector<16x512xi32>
    %3 = arith.sitofp %2 : vector<16x512xi32> to vector<16x512xf32>
    %cst = arith.constant 0.000000e+00 : f32
    %4 = vector.broadcast %cst : f32 to vector<4x512xf32>
    %c0 = arith.constant 0 : index
    %c0_0 = arith.constant 0 : index
    %c0_1 = arith.constant 0 : index
    %c0_2 = arith.constant 0 : index
    %5 = vector.load %arg2[%c0, %c0_0, %c0_1, %c0_2] : memref<1x2x3x512xf32, #tpu.memory_space<vmem>>, vector<1x1x3x512xf32>
    %6 = vector.shape_cast %5 : vector<1x1x3x512xf32> to vector<3x512xf32>
    %7 = vector.extract_strided_slice %6 {offsets = [0, 0], sizes = [1, 512], strides = [1, 1]} : vector<3x512xf32> to vector<1x512xf32>
    %8 = vector.extract_strided_slice %6 {offsets = [1, 0], sizes = [1, 512], strides = [1, 1]} : vector<3x512xf32> to vector<1x512xf32>
    %9 = vector.extract_strided_slice %6 {offsets = [2, 0], sizes = [1, 512], strides = [1, 1]} : vector<3x512xf32> to vector<1x512xf32>
    %10 = math.floor %7 : vector<1x512xf32>
    %11 = arith.subf %7, %10 : vector<1x512xf32>
    %12 = math.floor %8 : vector<1x512xf32>
    %13 = arith.subf %8, %12 : vector<1x512xf32>
    %14 = vector.broadcast %10 : vector<1x512xf32> to vector<16x512xf32>
    %15 = arith.cmpf oeq, %1, %14 : vector<16x512xf32>
    %cst_3 = arith.constant 1.000000e+00 : f32
    %16 = vector.broadcast %cst_3 : f32 to vector<1x512xf32>
    %17 = arith.subf %16, %11 : vector<1x512xf32>
    %cst_4 = arith.constant 0.000000e+00 : f32
    %18 = vector.shape_cast %17 : vector<1x512xf32> to vector<1x512xf32>
    %19 = vector.broadcast %18 : vector<1x512xf32> to vector<16x512xf32>
    %20 = vector.broadcast %cst_4 : f32 to vector<16x512xf32>
    %21 = arith.select %15, %19, %20 : vector<16x512xi1>, vector<16x512xf32>
    %cst_5 = arith.constant 1.000000e+00 : f32
    %22 = vector.broadcast %cst_5 : f32 to vector<1x512xf32>
    %23 = arith.addf %10, %22 : vector<1x512xf32>
    %24 = vector.broadcast %23 : vector<1x512xf32> to vector<16x512xf32>
    %25 = arith.cmpf oeq, %1, %24 : vector<16x512xf32>
    %cst_6 = arith.constant 0.000000e+00 : f32
    %26 = vector.shape_cast %11 : vector<1x512xf32> to vector<1x512xf32>
    %27 = vector.broadcast %26 : vector<1x512xf32> to vector<16x512xf32>
    %28 = vector.broadcast %cst_6 : f32 to vector<16x512xf32>
    %29 = arith.select %25, %27, %28 : vector<16x512xi1>, vector<16x512xf32>
    %30 = arith.addf %21, %29 : vector<16x512xf32>
    %31 = vector.broadcast %12 : vector<1x512xf32> to vector<16x512xf32>
    %32 = arith.cmpf oeq, %3, %31 : vector<16x512xf32>
    %cst_7 = arith.constant 1.000000e+00 : f32
    %33 = vector.broadcast %cst_7 : f32 to vector<1x512xf32>
    %34 = arith.subf %33, %13 : vector<1x512xf32>
    %cst_8 = arith.constant 0.000000e+00 : f32
    %35 = vector.shape_cast %34 : vector<1x512xf32> to vector<1x512xf32>
    %36 = vector.broadcast %35 : vector<1x512xf32> to vector<16x512xf32>
    %37 = vector.broadcast %cst_8 : f32 to vector<16x512xf32>
    %38 = arith.select %32, %36, %37 : vector<16x512xi1>, vector<16x512xf32>
    %cst_9 = arith.constant 1.000000e+00 : f32
    %39 = vector.broadcast %cst_9 : f32 to vector<1x512xf32>
    %40 = arith.addf %12, %39 : vector<1x512xf32>
    %41 = vector.broadcast %40 : vector<1x512xf32> to vector<16x512xf32>
    %42 = arith.cmpf oeq, %3, %41 : vector<16x512xf32>
    %cst_10 = arith.constant 0.000000e+00 : f32
    %43 = vector.shape_cast %13 : vector<1x512xf32> to vector<1x512xf32>
    %44 = vector.broadcast %43 : vector<1x512xf32> to vector<16x512xf32>
    %45 = vector.broadcast %cst_10 : f32 to vector<16x512xf32>
    %46 = arith.select %42, %44, %45 : vector<16x512xi1>, vector<16x512xf32>
    %47 = arith.addf %38, %46 : vector<16x512xf32>
    %c0_11 = arith.constant 0 : index
    %c0_12 = arith.constant 0 : index
    %c0_13 = arith.constant 0 : index
    %c0_14 = arith.constant 0 : index
    %48 = vector.load %arg3[%c0_11, %c0_12, %c0_13, %c0_14] : memref<1x2x64x16xbf16, #tpu.memory_space<vmem>>, vector<1x1x64x16xbf16>
    %49 = vector.shape_cast %48 : vector<1x1x64x16xbf16> to vector<64x16xbf16>
    %50 = arith.truncf %30 : vector<16x512xf32> to vector<16x512xbf16>
    %cst_15 = arith.constant dense<0.000000e+00> : vector<64x512xf32>
    %51 = tpu.matmul %49, %50, %cst_15 {dimension_numbers = #tpu.dot_dimension_numbers<[1], [0], [0], [1], [0, 0, 1, 1], [], []>} : vector<64x16xbf16>, vector<16x512xbf16>, vector<64x512xf32> -> vector<64x512xf32>
    %52 = vector.shape_cast %51 : vector<64x512xf32> to vector<4x16x512xf32>
    %53 = vector.shape_cast %47 : vector<16x512xf32> to vector<1x16x512xf32>
    %54 = vector.broadcast %53 : vector<1x16x512xf32> to vector<4x16x512xf32>
    %55 = arith.mulf %52, %54 : vector<4x16x512xf32>
    %cst_16 = arith.constant dense<0.000000e+00> : vector<4x512xf32>
    %56 = vector.multi_reduction <add>, %55, %cst_16 [1] : vector<4x16x512xf32> to vector<4x512xf32>
    %57 = vector.broadcast %9 : vector<1x512xf32> to vector<4x512xf32>
    %58 = arith.mulf %56, %57 : vector<4x512xf32>
    %59 = arith.addf %4, %58 : vector<4x512xf32>
    %c0_17 = arith.constant 0 : index
    %c1 = arith.constant 1 : index
    %c0_18 = arith.constant 0 : index
    %c0_19 = arith.constant 0 : index
    %60 = vector.load %arg2[%c0_17, %c1, %c0_18, %c0_19] : memref<1x2x3x512xf32, #tpu.memory_space<vmem>>, vector<1x1x3x512xf32>
    %61 = vector.shape_cast %60 : vector<1x1x3x512xf32> to vector<3x512xf32>
    %62 = vector.extract_strided_slice %61 {offsets = [0, 0], sizes = [1, 512], strides = [1, 1]} : vector<3x512xf32> to vector<1x512xf32>
    %63 = vector.extract_strided_slice %61 {offsets = [1, 0], sizes = [1, 512], strides = [1, 1]} : vector<3x512xf32> to vector<1x512xf32>
    %64 = vector.extract_strided_slice %61 {offsets = [2, 0], sizes = [1, 512], strides = [1, 1]} : vector<3x512xf32> to vector<1x512xf32>
    %65 = math.floor %62 : vector<1x512xf32>
    %66 = arith.subf %62, %65 : vector<1x512xf32>
    %67 = math.floor %63 : vector<1x512xf32>
    %68 = arith.subf %63, %67 : vector<1x512xf32>
    %69 = vector.broadcast %65 : vector<1x512xf32> to vector<16x512xf32>
    %70 = arith.cmpf oeq, %1, %69 : vector<16x512xf32>
    %cst_20 = arith.constant 1.000000e+00 : f32
    %71 = vector.broadcast %cst_20 : f32 to vector<1x512xf32>
    %72 = arith.subf %71, %66 : vector<1x512xf32>
    %cst_21 = arith.constant 0.000000e+00 : f32
    %73 = vector.shape_cast %72 : vector<1x512xf32> to vector<1x512xf32>
    %74 = vector.broadcast %73 : vector<1x512xf32> to vector<16x512xf32>
    %75 = vector.broadcast %cst_21 : f32 to vector<16x512xf32>
    %76 = arith.select %70, %74, %75 : vector<16x512xi1>, vector<16x512xf32>
    %cst_22 = arith.constant 1.000000e+00 : f32
    %77 = vector.broadcast %cst_22 : f32 to vector<1x512xf32>
    %78 = arith.addf %65, %77 : vector<1x512xf32>
    %79 = vector.broadcast %78 : vector<1x512xf32> to vector<16x512xf32>
    %80 = arith.cmpf oeq, %1, %79 : vector<16x512xf32>
    %cst_23 = arith.constant 0.000000e+00 : f32
    %81 = vector.shape_cast %66 : vector<1x512xf32> to vector<1x512xf32>
    %82 = vector.broadcast %81 : vector<1x512xf32> to vector<16x512xf32>
    %83 = vector.broadcast %cst_23 : f32 to vector<16x512xf32>
    %84 = arith.select %80, %82, %83 : vector<16x512xi1>, vector<16x512xf32>
    %85 = arith.addf %76, %84 : vector<16x512xf32>
    %86 = vector.broadcast %67 : vector<1x512xf32> to vector<16x512xf32>
    %87 = arith.cmpf oeq, %3, %86 : vector<16x512xf32>
    %cst_24 = arith.constant 1.000000e+00 : f32
    %88 = vector.broadcast %cst_24 : f32 to vector<1x512xf32>
    %89 = arith.subf %88, %68 : vector<1x512xf32>
    %cst_25 = arith.constant 0.000000e+00 : f32
    %90 = vector.shape_cast %89 : vector<1x512xf32> to vector<1x512xf32>
    %91 = vector.broadcast %90 : vector<1x512xf32> to vector<16x512xf32>
    %92 = vector.broadcast %cst_25 : f32 to vector<16x512xf32>
    %93 = arith.select %87, %91, %92 : vector<16x512xi1>, vector<16x512xf32>
    %cst_26 = arith.constant 1.000000e+00 : f32
    %94 = vector.broadcast %cst_26 : f32 to vector<1x512xf32>
    %95 = arith.addf %67, %94 : vector<1x512xf32>
    %96 = vector.broadcast %95 : vector<1x512xf32> to vector<16x512xf32>
    %97 = arith.cmpf oeq, %3, %96 : vector<16x512xf32>
    %cst_27 = arith.constant 0.000000e+00 : f32
    %98 = vector.shape_cast %68 : vector<1x512xf32> to vector<1x512xf32>
    %99 = vector.broadcast %98 : vector<1x512xf32> to vector<16x512xf32>
    %100 = vector.broadcast %cst_27 : f32 to vector<16x512xf32>
    %101 = arith.select %97, %99, %100 : vector<16x512xi1>, vector<16x512xf32>
    %102 = arith.addf %93, %101 : vector<16x512xf32>
    %c0_28 = arith.constant 0 : index
    %c1_29 = arith.constant 1 : index
    %c0_30 = arith.constant 0 : index
    %c0_31 = arith.constant 0 : index
    %103 = vector.load %arg3[%c0_28, %c1_29, %c0_30, %c0_31] : memref<1x2x64x16xbf16, #tpu.memory_space<vmem>>, vector<1x1x64x16xbf16>
    %104 = vector.shape_cast %103 : vector<1x1x64x16xbf16> to vector<64x16xbf16>
    %105 = arith.truncf %85 : vector<16x512xf32> to vector<16x512xbf16>
    %cst_32 = arith.constant dense<0.000000e+00> : vector<64x512xf32>
    %106 = tpu.matmul %104, %105, %cst_32 {dimension_numbers = #tpu.dot_dimension_numbers<[1], [0], [0], [1], [0, 0, 1, 1], [], []>} : vector<64x16xbf16>, vector<16x512xbf16>, vector<64x512xf32> -> vector<64x512xf32>
    %107 = vector.shape_cast %106 : vector<64x512xf32> to vector<4x16x512xf32>
    %108 = vector.shape_cast %102 : vector<16x512xf32> to vector<1x16x512xf32>
    %109 = vector.broadcast %108 : vector<1x16x512xf32> to vector<4x16x512xf32>
    %110 = arith.mulf %107, %109 : vector<4x16x512xf32>
    %cst_33 = arith.constant dense<0.000000e+00> : vector<4x512xf32>
    %111 = vector.multi_reduction <add>, %110, %cst_33 [1] : vector<4x16x512xf32> to vector<4x512xf32>
    %112 = vector.broadcast %64 : vector<1x512xf32> to vector<4x512xf32>
    %113 = arith.mulf %111, %112 : vector<4x512xf32>
    %114 = arith.addf %59, %113 : vector<4x512xf32>
    %cst_34 = arith.constant 0.000000e+00 : f32
    %cst_35 = arith.constant 1.000000e+00 : f32
    %115 = vector.broadcast %cst_34 : f32 to vector<4x512xf32>
    %116 = arith.maximumf %115, %114 : vector<4x512xf32>
    %117 = vector.broadcast %cst_35 : f32 to vector<4x512xf32>
    %118 = arith.minimumf %117, %116 : vector<4x512xf32>
    %c0_36 = arith.constant 0 : index
    %c0_37 = arith.constant 0 : index
    %c0_38 = arith.constant 0 : index
    %119 = vector.load %arg4[%c0_36, %c0_37, %c0_38] : memref<1x4x512xf32, #tpu.memory_space<vmem>>, vector<1x4x512xf32>
    %120 = vector.shape_cast %119 : vector<1x4x512xf32> to vector<4x512xf32>
    %121 = vector.shape_cast %118 : vector<4x512xf32> to vector<1x4x512xf32>
    tpu.vector_store %arg4[%c0_36, %c0_37, %c0_38], %121 {strides = array<i32>} : memref<1x4x512xf32, #tpu.memory_space<vmem>>, vector<1x4x512xf32>,
    return
  }
  func.func @transform_0(%arg0: i32, %arg1: i32) -> (i32, i32, i32, i32) {
    %c0_i32 = arith.constant 0 : i32
    %c0_i32_0 = arith.constant 0 : i32
    %c0_i32_1 = arith.constant 0 : i32
    return %arg0, %c0_i32, %c0_i32_0, %arg1 : i32, i32, i32, i32
  }
  func.func @transform_1(%arg0: i32, %arg1: i32) -> (i32, i32, i32, i32) {
    %c0_i32 = arith.constant 0 : i32
    %c0_i32_0 = arith.constant 0 : i32
    %c0_i32_1 = arith.constant 0 : i32
    %c0_i32_2 = arith.constant 0 : i32
    return %arg0, %c0_i32, %c0_i32_0, %c0_i32_1 : i32, i32, i32, i32
  }
  func.func @transform_2(%arg0: i32, %arg1: i32) -> (i32, i32, i32) {
    %c0_i32 = arith.constant 0 : i32
    %c0_i32_0 = arith.constant 0 : i32
    return %arg0, %c0_i32, %arg1 : i32, i32, i32
  }
}

</mosaic_0001>

<llo_original>
// kernel: tpu_custom_call.1
$region0: #{tpu_custom_call.1}
  #allocation0 [shape = 'u32[]', space=smem, size = 0x4, offset = 0x4, fixed_abs, tag = 'smem constant byte address 0x4 - core index']
  #allocation1 [shape = 'u32[144,128]{1,0:T(1,128)}', space=vmem, size = 0x12000, scoped, tag = 'internal scratch']
  %s0 = inlined_call_operand.vmem [shape: f32[2,2,3,512], index: 0, kind: input, shape index: {}]
  %s1 = inlined_call_operand.vmem [shape: bf16[2,2,64,16], index: 1, kind: input, shape index: {}]
  %s2 = inlined_call_operand.hbm [shape: f32[2,4,512], index: 2, kind: output, shape index: {}]
  %s3 = sld [smem:[#allocation0]]
  $region41: #{tpu_custom_call.1} parent=0
    _
  %s5 = ssub.s32 1, %s3
  %s6 = scalar_select 0, %s5, %s3
  $region1: #{tpu_custom_call.1} parent=0
    #allocation2 [shape = 'u8[16384]{0}', space=vmem, size = 0x4000, scoped, tag = 'output window, operand 0']
    #allocation3 [shape = 's32[2]{0}', space=sflag, size = 0x8, scoped, tag = 'scoped memory for tpu_custom_call.1']
    %7 = vsyncpa [#allocation3], 0
    %s8 = scalar_lea.sflag [#allocation3], 1
    %9 = vsyncpa %s8, 0
    loop: start=0, step=1, limit=4
    $region2: #{tpu_custom_call.1} parent=1 // loop_pre_header
      _
    $region3: #{tpu_custom_call.1} parent=1 // loop_header
      %s11 = sphi 0, %s15
      %p12 = scmp.ge.s32.totalorder %s11, 4
      %s18 = sphi 0, %s30
      %s19 = sphi 0, %s26
      %s20 = sphi 0, %s18
      %s21 = sphi 0, %s19
      %s22 = sphi 0, %s20
      %s23 = sphi 0, %s21
      %s35 = sphi 0, %s37
      %s38 = sphi 0, %s35
      %s39 = sphi 0, %s38
      %s55 = sphi 0, %s39
      %s61 = sphi 0, %s63
      %s64 = sphi 0, %s61
      %s65 = sphi 0, %s64
      %s81 = sphi 0, %s65
      %s89 = sphi 0, %s91
      %s92 = sphi 0, %s89
      %s93 = sphi 0, %s92
      %s109 = sphi 0, %s93
    $region4: #{tpu_custom_call.1} parent=1 // loop_header_branch
      %14 = sbr.rel (%p12) target = $region8
    $region5: #{tpu_custom_call.1} parent=1 // loop_body
      %s16 = ssub.s32 %s11, 1
      %s17 = ssub.s32 %s11, 2
      %s24 = sadd.s32 1, %s19
      %p25 = scmp.ge.s32.totalorder %s24, 1
      %s26 = scalar_select %p25, 0, %s24
      %s27 = sadd.s32 1, %s18
      %s28 = scalar_select %p25, %s27, %s18
      %p29 = scmp.ge.s32.totalorder %s28, 2
      %s30 = scalar_select %p29, 0, %s28
      %s31 = ssub.s32 %s18, %s30
      %s32 = ssub.s32 %s19, %s26
      %s33 = sor.u32 %s31, %s32
      %p34 = scmp.eq.s32.totalorder %s33, 0
      %s36 = sadd.s32 %s35, 1
      %s37 = scalar_select %p34, %s35, %s36
      %p40 = pneg %p34
      %p41 = scmp.eq.s32.totalorder %s11, 1
      %p42 = por %p40, %p41
      %p43 = scmp.ne.s32.totalorder %s35, %s38
      %p44 = scmp.eq.s32.totalorder %s11, 0
      %p45 = por %p43, %p44
      %p46 = scmp.ne.s32.totalorder %s35, %s38
      %p47 = scmp.eq.s32.totalorder %s16, 1
      %p48 = por %p46, %p47
      %p49 = scmp.ne.s32.totalorder %s38, %s39
      %p50 = scmp.eq.s32.totalorder %s16, 0
      %p51 = por %p49, %p50
      %p52 = scmp.ne.s32.totalorder %s38, %s39
      %p53 = scmp.eq.s32.totalorder %s17, 1
      %p54 = por %p52, %p53
      %p56 = scmp.ne.s32.totalorder %s39, %s55
      %p57 = scmp.eq.s32.totalorder %s17, 0
      %p58 = por %p56, %p57
      %s59 = ssub.s32 %s18, %s30
      %p60 = scmp.eq.s32.totalorder %s59, 0
      %s62 = sadd.s32 %s61, 1
      %s63 = scalar_select %p60, %s61, %s62
      %p66 = pneg %p60
      %p67 = scmp.eq.s32.totalorder %s11, 1
      %p68 = por %p66, %p67
      %p69 = scmp.ne.s32.totalorder %s61, %s64
      %p70 = scmp.eq.s32.totalorder %s11, 0
      %p71 = por %p69, %p70
      %p72 = scmp.ne.s32.totalorder %s61, %s64
      %p73 = scmp.eq.s32.totalorder %s16, 1
      %p74 = por %p72, %p73
      %p75 = scmp.ne.s32.totalorder %s64, %s65
      %p76 = scmp.eq.s32.totalorder %s16, 0
      %p77 = por %p75, %p76
      %p78 = scmp.ne.s32.totalorder %s64, %s65
      %p79 = scmp.eq.s32.totalorder %s17, 1
      %p80 = por %p78, %p79
      %p82 = scmp.ne.s32.totalorder %s65, %s81
      %p83 = scmp.eq.s32.totalorder %s17, 0
      %p84 = por %p82, %p83
      %s85 = ssub.s32 %s18, %s30
      %s86 = ssub.s32 %s19, %s26
      %s87 = sor.u32 %s85, %s86
      %p88 = scmp.eq.s32.totalorder %s87, 0
      %s90 = sadd.s32 %s89, 1
      %s91 = scalar_select %p88, %s89, %s90
      %p94 = pneg %p88
      %p95 = scmp.eq.s32.totalorder %s11, 1
      %p96 = por %p94, %p95
      %p97 = scmp.ne.s32.totalorder %s89, %s92
      %p98 = scmp.eq.s32.totalorder %s11, 0
      %p99 = por %p97, %p98
      %p100 = scmp.ne.s32.totalorder %s89, %s92
      %p101 = scmp.eq.s32.totalorder %s16, 1
      %p102 = por %p100, %p101
      %p103 = scmp.ne.s32.totalorder %s92, %s93
      %p104 = scmp.eq.s32.totalorder %s16, 0
      %p105 = por %p103, %p104
      %p106 = scmp.ne.s32.totalorder %s92, %s93
      %p107 = scmp.eq.s32.totalorder %s17, 1
      %p108 = por %p106, %p107
      %p110 = scmp.ne.s32.totalorder %s93, %s109
      %p111 = scmp.eq.s32.totalorder %s17, 0
      %p112 = por %p110, %p111
      %p113 = scmp.le.s32.totalorder 1, %s11
      %p114 = scmp.lt.s32.totalorder %s11, 3
      %p115 = pnand %p113, %p114
      %p116 = pneg %p115
      // Predicated region
      $region9: #{tpu_custom_call.1} parent=5 // pred_check
        _
      $region10: #{tpu_custom_call.1} parent=5 // pred_check_branch
        %118 = sbr.rel (%p115) target = $region12
      $region11: #{tpu_custom_call.1} parent=5 // pred_region
        %s119 = ssub.s32 %s11, 1
      $region12: #{tpu_custom_call.1} parent=5 // pred_fallthru
        _
      %p120 = scmp.lt.s32.totalorder %s11, 2
      // Predicated region
      $region13: #{tpu_custom_call.1} parent=5 // pred_check
        %p121 = pneg %p120
      $region14: #{tpu_custom_call.1} parent=5 // pred_check_branch
        %123 = sbr.rel (%p121) target = $region16
      $region15: #{tpu_custom_call.1} parent=5 // pred_region
        // Predicated region
        $region17: #{tpu_custom_call.1} parent=15 // pred_check
          %p124 = pneg %p45
        $region18: #{tpu_custom_call.1} parent=15 // pred_check_branch
          %126 = sbr.rel (%p124) target = $region20
        $region19: #{tpu_custom_call.1} parent=15 // pred_region
          %s127 = smul.u32 4, %s19
          %p128 = scmp.lt.s32.totalorder %s18, 1
          %s129 = scalar_select %p128, %s18, 1
          %p130 = scmp.lt.s32.totalorder %s127, 3
          %s131 = scalar_select %p130, %s127, 3
          %s132 = smul.addr %s129, 8
          %s133 = sadd.s32 %s131, %s132
          %s134 = smul.addr %s133, 4
          %s135 = scalar_lea.vmem %s0, %s134
          %s136 = smul.u32 4, %s19
        $region20: #{tpu_custom_call.1} parent=15 // pred_fallthru
          _
        // Predicated region
        $region21: #{tpu_custom_call.1} parent=15 // pred_check
          %p137 = pneg %p71
        $region22: #{tpu_custom_call.1} parent=15 // pred_check_branch
          %139 = sbr.rel (%p137) target = $region24
        $region23: #{tpu_custom_call.1} parent=15 // pred_region
          %p140 = scmp.lt.s32.totalorder %s18, 1
          %s141 = scalar_select %p140, %s18, 1
          %s142 = smul.addr %s141, 16
          %s143 = smul.addr %s142, 4
          %s144 = scalar_lea.vmem %s1, %s143
        $region24: #{tpu_custom_call.1} parent=15 // pred_fallthru
          _
      $region16: #{tpu_custom_call.1} parent=5 // pred_fallthru
        _
      %p145 = scmp.le.s32.totalorder 1, %s11
      %p146 = scmp.lt.s32.totalorder %s11, 3
      %p147 = pnand %p145, %p146
      %p148 = pneg %p147
      // Predicated region
      $region25: #{tpu_custom_call.1} parent=5 // pred_check
        _
      $region26: #{tpu_custom_call.1} parent=5 // pred_check_branch
        %150 = sbr.rel (%p147) target = $region28
      $region27: #{tpu_custom_call.1} parent=5 // pred_region
        %s151 = ssub.s32 %s11, 1
        %s152 = smul.u32 4, %s21
        %p153 = scmp.lt.s32.totalorder %s20, 1
        %s154 = scalar_select %p153, %s20, 1
        %p155 = scmp.lt.s32.totalorder %s152, 3
        %s156 = scalar_select %p155, %s152, 3
        %s157 = smul.addr %s154, 8
        %s158 = sadd.s32 %s156, %s157
        %s159 = smul.addr %s158, 4
        %s160 = scalar_lea.vmem %s0, %s159
        %p161 = pneg %p51
        %p162 = pneg %p48
        %p163 = scmp.lt.s32.totalorder %s20, 1
        %s164 = scalar_select %p163, %s20, 1
        %s165 = smul.addr %s164, 16
        %s166 = smul.addr %s165, 4
        %s167 = scalar_lea.vmem %s1, %s166
        %p168 = pneg %p77
        %p169 = pneg %p74
        %p170 = pneg %p105
        %p171 = pneg %p102
        %s172 = sand.u32 %s92, 1
        %s173 = scalar_lea.sflag [#allocation3], %s172
        %s174 = sand.u32 %s92, 1
        %s175 = smul.addr %s174, 16
        %s176 = scalar_lea.vmem [#allocation2], %s175
        %s177 = smul.u32 4, %s21
        %p178 = scmp.lt.s32.totalorder %s20, 1
        %s179 = scalar_select %p178, %s20, 1
        %p180 = scmp.lt.s32.totalorder %s177, 3
        %s181 = scalar_select %p180, %s177, 3
        %s182 = smul.addr %s179, 8
        %s183 = sadd.s32 %s181, %s182
        %s184 = smul.addr %s183, 4
        %s185 = scalar_lea.vmem %s0, %s184
        %s186 = smul.u32 4, %s21
        %p187 = scmp.lt.s32.totalorder %s20, 1
        %s188 = scalar_select %p187, %s20, 1
        %s189 = smul.addr %s188, 16
        %s190 = smul.addr %s189, 4
        %s191 = scalar_lea.vmem %s1, %s190
        %s192 = smul.u32 4, %s21
        %v194 = vlaneseq
        %v195 = vshrl.u32 %v194, 7
        %v196 = vadd.s32 %v195, 8
        %v197 = vcvt.s32.f32 %v195
        %v198 = vcvt.s32.f32 %v196
        %v199 = vld [vmem:[%s185] sm:$0x77]
        %v200 = vld [vmem:[%s185 + $0x8] sm:$0x77]
        %v201 = vfloor.f32 %v199
        %v202 = vfloor.f32 %v200
        %v203 = vsub.f32 %v199, %v201
        %v204 = vsub.f32 %v200, %v202
        %v207 = vlaneseq
        %v208 = vshrl.u32 %v207, 7
        %v209 = vsub.s32 0, %v208
        %v210 = vrot.slane %v201, %v209
        %v211 = vlaneseq
        %v212 = vshrl.u32 %v211, 7
        %v213 = vsub.s32 4, %v212
        %v214 = vrot.slane %v201, %v213
        %v215 = vlaneseq
        %v216 = vshrl.u32 %v215, 7
        %v217 = vsub.s32 0, %v216
        %v218 = vrot.slane %v202, %v217
        %v219 = vlaneseq
        %v220 = vshrl.u32 %v219, 7
        %v221 = vsub.s32 4, %v220
        %v222 = vrot.slane %v202, %v221
        %v227 = vlaneseq
        %v228 = vshrl.u32 %v227, 7
        %v229 = vsub.s32 0, %v228
        %v230 = vrot.slane %v210, %v229
        %v231 = vlaneseq
        %v232 = vshrl.u32 %v231, 7
        %v233 = vsub.s32 0, %v232
        %v234 = vrot.slane %v214, %v233
        %v235 = vlaneseq
        %v236 = vshrl.u32 %v235, 7
        %v237 = vsub.s32 0, %v236
        %v238 = vrot.slane %v218, %v237
        %v239 = vlaneseq
        %v240 = vshrl.u32 %v239, 7
        %v241 = vsub.s32 0, %v240
        %v242 = vrot.slane %v222, %v241
        %vm243 = vcmp.eq.f32.partialorder %v197, %v230
        %vm244 = vcmp.eq.f32.partialorder %v197, %v234
        %vm245 = vcmp.eq.f32.partialorder %v197, %v238
        %vm246 = vcmp.eq.f32.partialorder %v197, %v242
        %vm247 = vcmp.eq.f32.partialorder %v198, %v230
        %vm248 = vcmp.eq.f32.partialorder %v198, %v234
        %vm249 = vcmp.eq.f32.partialorder %v198, %v238
        %vm250 = vcmp.eq.f32.partialorder %v198, %v242
        %v251 = vsub.f32 1.0, %v203
        %v252 = vsub.f32 1.0, %v204
        %v255 = vlaneseq
        %v256 = vshrl.u32 %v255, 7
        %v257 = vsub.s32 0, %v256
        %v258 = vrot.slane %v251, %v257
        %v259 = vlaneseq
        %v260 = vshrl.u32 %v259, 7
        %v261 = vsub.s32 4, %v260
        %v262 = vrot.slane %v251, %v261
        %v263 = vlaneseq
        %v264 = vshrl.u32 %v263, 7
        %v265 = vsub.s32 0, %v264
        %v266 = vrot.slane %v252, %v265
        %v267 = vlaneseq
        %v268 = vshrl.u32 %v267, 7
        %v269 = vsub.s32 4, %v268
        %v270 = vrot.slane %v252, %v269
        %v275 = vlaneseq
        %v276 = vshrl.u32 %v275, 7
        %v277 = vsub.s32 0, %v276
        %v278 = vrot.slane %v258, %v277
        %v279 = vlaneseq
        %v280 = vshrl.u32 %v279, 7
        %v281 = vsub.s32 0, %v280
        %v282 = vrot.slane %v262, %v281
        %v283 = vlaneseq
        %v284 = vshrl.u32 %v283, 7
        %v285 = vsub.s32 0, %v284
        %v286 = vrot.slane %v266, %v285
        %v287 = vlaneseq
        %v288 = vshrl.u32 %v287, 7
        %v289 = vsub.s32 0, %v288
        %v290 = vrot.slane %v270, %v289
        %v291 = vsel %vm243, %v278, 0.0
        %v292 = vsel %vm244, %v282, 0.0
        %v293 = vsel %vm245, %v286, 0.0
        %v294 = vsel %vm246, %v290, 0.0
        %v295 = vsel %vm247, %v278, 0.0
        %v296 = vsel %vm248, %v282, 0.0
        %v297 = vsel %vm249, %v286, 0.0
        %v298 = vsel %vm250, %v290, 0.0
        %v299 = vadd.f32 %v201, 1.0
        %v300 = vadd.f32 %v202, 1.0
        %v303 = vlaneseq
        %v304 = vshrl.u32 %v303, 7
        %v305 = vsub.s32 0, %v304
        %v306 = vrot.slane %v299, %v305
        %v307 = vlaneseq
        %v308 = vshrl.u32 %v307, 7
        %v309 = vsub.s32 4, %v308
        %v310 = vrot.slane %v299, %v309
        %v311 = vlaneseq
        %v312 = vshrl.u32 %v311, 7
        %v313 = vsub.s32 0, %v312
        %v314 = vrot.slane %v300, %v313
        %v315 = vlaneseq
        %v316 = vshrl.u32 %v315, 7
        %v317 = vsub.s32 4, %v316
        %v318 = vrot.slane %v300, %v317
        %v323 = vlaneseq
        %v324 = vshrl.u32 %v323, 7
        %v325 = vsub.s32 0, %v324
        %v326 = vrot.slane %v306, %v325
        %v327 = vlaneseq
        %v328 = vshrl.u32 %v327, 7
        %v329 = vsub.s32 0, %v328
        %v330 = vrot.slane %v310, %v329
        %v331 = vlaneseq
        %v332 = vshrl.u32 %v331, 7
        %v333 = vsub.s32 0, %v332
        %v334 = vrot.slane %v314, %v333
        %v335 = vlaneseq
        %v336 = vshrl.u32 %v335, 7
        %v337 = vsub.s32 0, %v336
        %v338 = vrot.slane %v318, %v337
        %vm339 = vcmp.eq.f32.partialorder %v197, %v326
        %vm340 = vcmp.eq.f32.partialorder %v197, %v330
        %vm341 = vcmp.eq.f32.partialorder %v197, %v334
        %vm342 = vcmp.eq.f32.partialorder %v197, %v338
        %vm343 = vcmp.eq.f32.partialorder %v198, %v326
        %vm344 = vcmp.eq.f32.partialorder %v198, %v330
        %vm345 = vcmp.eq.f32.partialorder %v198, %v334
        %vm346 = vcmp.eq.f32.partialorder %v198, %v338
        %v349 = vlaneseq
        %v350 = vshrl.u32 %v349, 7
        %v351 = vsub.s32 0, %v350
        %v352 = vrot.slane %v203, %v351
        %v353 = vlaneseq
        %v354 = vshrl.u32 %v353, 7
        %v355 = vsub.s32 4, %v354
        %v356 = vrot.slane %v203, %v355
        %v357 = vlaneseq
        %v358 = vshrl.u32 %v357, 7
        %v359 = vsub.s32 0, %v358
        %v360 = vrot.slane %v204, %v359
        %v361 = vlaneseq
        %v362 = vshrl.u32 %v361, 7
        %v363 = vsub.s32 4, %v362
        %v364 = vrot.slane %v204, %v363
        %v369 = vlaneseq
        %v370 = vshrl.u32 %v369, 7
        %v371 = vsub.s32 0, %v370
        %v372 = vrot.slane %v352, %v371
        %v373 = vlaneseq
        %v374 = vshrl.u32 %v373, 7
        %v375 = vsub.s32 0, %v374
        %v376 = vrot.slane %v356, %v375
        %v377 = vlaneseq
        %v378 = vshrl.u32 %v377, 7
        %v379 = vsub.s32 0, %v378
        %v380 = vrot.slane %v360, %v379
        %v381 = vlaneseq
        %v382 = vshrl.u32 %v381, 7
        %v383 = vsub.s32 0, %v382
        %v384 = vrot.slane %v364, %v383
        %v385 = vsel %vm339, %v372, 0.0
        %v386 = vsel %vm340, %v376, 0.0
        %v387 = vsel %vm341, %v380, 0.0
        %v388 = vsel %vm342, %v384, 0.0
        %v389 = vsel %vm343, %v372, 0.0
        %v390 = vsel %vm344, %v376, 0.0
        %v391 = vsel %vm345, %v380, 0.0
        %v392 = vsel %vm346, %v384, 0.0
        %v393 = vadd.f32 %v291, %v385
        %v394 = vadd.f32 %v292, %v386
        %v395 = vadd.f32 %v293, %v387
        %v396 = vadd.f32 %v294, %v388
        %v397 = vadd.f32 %v295, %v389
        %v398 = vadd.f32 %v296, %v390
        %v399 = vadd.f32 %v297, %v391
        %v400 = vadd.f32 %v298, %v392
        %v401 = vlaneseq
        %v402 = vshrl.u32 %v401, 7
        %v403 = vsub.s32 1, %v402
        %v404 = vrot.slane %v201, %v403
        %v405 = vlaneseq
        %v406 = vshrl.u32 %v405, 7
        %v407 = vsub.s32 5, %v406
        %v408 = vrot.slane %v201, %v407
        %v409 = vlaneseq
        %v410 = vshrl.u32 %v409, 7
        %v411 = vsub.s32 1, %v410
        %v412 = vrot.slane %v202, %v411
        %v413 = vlaneseq
        %v414 = vshrl.u32 %v413, 7
        %v415 = vsub.s32 5, %v414
        %v416 = vrot.slane %v202, %v415
        %v421 = vlaneseq
        %v422 = vshrl.u32 %v421, 7
        %v423 = vsub.s32 1, %v422
        %v424 = vrot.slane %v404, %v423
        %v425 = vlaneseq
        %v426 = vshrl.u32 %v425, 7
        %v427 = vsub.s32 1, %v426
        %v428 = vrot.slane %v408, %v427
        %v429 = vlaneseq
        %v430 = vshrl.u32 %v429, 7
        %v431 = vsub.s32 1, %v430
        %v432 = vrot.slane %v412, %v431
        %v433 = vlaneseq
        %v434 = vshrl.u32 %v433, 7
        %v435 = vsub.s32 1, %v434
        %v436 = vrot.slane %v416, %v435
        %vm437 = vcmp.eq.f32.partialorder %v197, %v424
        %vm438 = vcmp.eq.f32.partialorder %v197, %v428
        %vm439 = vcmp.eq.f32.partialorder %v197, %v432
        %vm440 = vcmp.eq.f32.partialorder %v197, %v436
        %vm441 = vcmp.eq.f32.partialorder %v198, %v424
        %vm442 = vcmp.eq.f32.partialorder %v198, %v428
        %vm443 = vcmp.eq.f32.partialorder %v198, %v432
        %vm444 = vcmp.eq.f32.partialorder %v198, %v436
        %v445 = vlaneseq
        %v446 = vshrl.u32 %v445, 7
        %v447 = vsub.s32 1, %v446
        %v448 = vrot.slane %v251, %v447
        %v449 = vlaneseq
        %v450 = vshrl.u32 %v449, 7
        %v451 = vsub.s32 5, %v450
        %v452 = vrot.slane %v251, %v451
        %v453 = vlaneseq
        %v454 = vshrl.u32 %v453, 7
        %v455 = vsub.s32 1, %v454
        %v456 = vrot.slane %v252, %v455
        %v457 = vlaneseq
        %v458 = vshrl.u32 %v457, 7
        %v459 = vsub.s32 5, %v458
        %v460 = vrot.slane %v252, %v459
        %v465 = vlaneseq
        %v466 = vshrl.u32 %v465, 7
        %v467 = vsub.s32 1, %v466
        %v468 = vrot.slane %v448, %v467
        %v469 = vlaneseq
        %v470 = vshrl.u32 %v469, 7
        %v471 = vsub.s32 1, %v470
        %v472 = vrot.slane %v452, %v471
        %v473 = vlaneseq
        %v474 = vshrl.u32 %v473, 7
        %v475 = vsub.s32 1, %v474
        %v476 = vrot.slane %v456, %v475
        %v477 = vlaneseq
        %v478 = vshrl.u32 %v477, 7
        %v479 = vsub.s32 1, %v478
        %v480 = vrot.slane %v460, %v479
        %v481 = vsel %vm437, %v468, 0.0
        %v482 = vsel %vm438, %v472, 0.0
        %v483 = vsel %vm439, %v476, 0.0
        %v484 = vsel %vm440, %v480, 0.0
        %v485 = vsel %vm441, %v468, 0.0
        %v486 = vsel %vm442, %v472, 0.0
        %v487 = vsel %vm443, %v476, 0.0
        %v488 = vsel %vm444, %v480, 0.0
        %v489 = vlaneseq
        %v490 = vshrl.u32 %v489, 7
        %v491 = vsub.s32 1, %v490
        %v492 = vrot.slane %v299, %v491
        %v493 = vlaneseq
        %v494 = vshrl.u32 %v493, 7
        %v495 = vsub.s32 5, %v494
        %v496 = vrot.slane %v299, %v495
        %v497 = vlaneseq
        %v498 = vshrl.u32 %v497, 7
        %v499 = vsub.s32 1, %v498
        %v500 = vrot.slane %v300, %v499
        %v501 = vlaneseq
        %v502 = vshrl.u32 %v501, 7
        %v503 = vsub.s32 5, %v502
        %v504 = vrot.slane %v300, %v503
        %v509 = vlaneseq
        %v510 = vshrl.u32 %v509, 7
        %v511 = vsub.s32 1, %v510
        %v512 = vrot.slane %v492, %v511
        %v513 = vlaneseq
        %v514 = vshrl.u32 %v513, 7
        %v515 = vsub.s32 1, %v514
        %v516 = vrot.slane %v496, %v515
        %v517 = vlaneseq
        %v518 = vshrl.u32 %v517, 7
        %v519 = vsub.s32 1, %v518
        %v520 = vrot.slane %v500, %v519
        %v521 = vlaneseq
        %v522 = vshrl.u32 %v521, 7
        %v523 = vsub.s32 1, %v522
        %v524 = vrot.slane %v504, %v523
        %vm525 = vcmp.eq.f32.partialorder %v197, %v512
        %vm526 = vcmp.eq.f32.partialorder %v197, %v516
        %vm527 = vcmp.eq.f32.partialorder %v197, %v520
        %vm528 = vcmp.eq.f32.partialorder %v197, %v524
        %vm529 = vcmp.eq.f32.partialorder %v198, %v512
        %vm530 = vcmp.eq.f32.partialorder %v198, %v516
        %vm531 = vcmp.eq.f32.partialorder %v198, %v520
        %vm532 = vcmp.eq.f32.partialorder %v198, %v524
        %v533 = vlaneseq
        %v534 = vshrl.u32 %v533, 7
        %v535 = vsub.s32 1, %v534
        %v536 = vrot.slane %v203, %v535
        %v537 = vlaneseq
        %v538 = vshrl.u32 %v537, 7
        %v539 = vsub.s32 5, %v538
        %v540 = vrot.slane %v203, %v539
        %v541 = vlaneseq
        %v542 = vshrl.u32 %v541, 7
        %v543 = vsub.s32 1, %v542
        %v544 = vrot.slane %v204, %v543
        %v545 = vlaneseq
        %v546 = vshrl.u32 %v545, 7
        %v547 = vsub.s32 5, %v546
        %v548 = vrot.slane %v204, %v547
        %v553 = vlaneseq
        %v554 = vshrl.u32 %v553, 7
        %v555 = vsub.s32 1, %v554
        %v556 = vrot.slane %v536, %v555
        %v557 = vlaneseq
        %v558 = vshrl.u32 %v557, 7
        %v559 = vsub.s32 1, %v558
        %v560 = vrot.slane %v540, %v559
        %v561 = vlaneseq
        %v562 = vshrl.u32 %v561, 7
        %v563 = vsub.s32 1, %v562
        %v564 = vrot.slane %v544, %v563
        %v565 = vlaneseq
        %v566 = vshrl.u32 %v565, 7
        %v567 = vsub.s32 1, %v566
        %v568 = vrot.slane %v548, %v567
        %v569 = vsel %vm525, %v556, 0.0
        %v570 = vsel %vm526, %v560, 0.0
        %v571 = vsel %vm527, %v564, 0.0
        %v572 = vsel %vm528, %v568, 0.0
        %v573 = vsel %vm529, %v556, 0.0
        %v574 = vsel %vm530, %v560, 0.0
        %v575 = vsel %vm531, %v564, 0.0
        %v576 = vsel %vm532, %v568, 0.0
        %v577 = vadd.f32 %v481, %v569
        %v578 = vadd.f32 %v482, %v570
        %v579 = vadd.f32 %v483, %v571
        %v580 = vadd.f32 %v484, %v572
        %v581 = vadd.f32 %v485, %v573
        %v582 = vadd.f32 %v486, %v574
        %v583 = vadd.f32 %v487, %v575
        %v584 = vadd.f32 %v488, %v576
        %v585 = vld [vmem:[%s191] sm:$0xf]
        %v586 = vld [vmem:[%s191 + $0x4] sm:$0xf]
        %v587 = vld [vmem:[%s191 + $0x8] sm:$0xf]
        %v588 = vld [vmem:[%s191 + $0xc] sm:$0xf]
        %v589 = vld [vmem:[%s191 + $0x10] sm:$0xf]
        %v590 = vld [vmem:[%s191 + $0x14] sm:$0xf]
        %v591 = vld [vmem:[%s191 + $0x18] sm:$0xf]
        %v592 = vld [vmem:[%s191 + $0x1c] sm:$0xf]
        %v593 = vpack.c.bf16 %v397, %v393
        %v594 = vpack.c.bf16 %v398, %v394
        %v595 = vpack.c.bf16 %v399, %v395
        %v596 = vpack.c.bf16 %v400, %v396
        %v605 = vunpack.c.l.b16 %v585
        %v606 = vunpack.c.l.b16 %v586
        %v607 = vunpack.c.l.b16 %v587
        %v608 = vunpack.c.l.b16 %v588
        %v609 = vunpack.c.l.b16 %v589
        %v610 = vunpack.c.l.b16 %v590
        %v611 = vunpack.c.l.b16 %v591
        %v612 = vunpack.c.l.b16 %v592
        %v613 = vpack.c.b16 %v606, %v605
        %v614 = vpack.c.b16 %v608, %v607
        %v615 = vpack.c.b16 %v610, %v609
        %v616 = vpack.c.b16 %v612, %v611
        %vm617 = vcmask 130048
        %v619 = vsel %vm617, %v613, 0
        %v622 = vsel %vm617, %v614, 0
        %v625 = vsel %vm617, %v615, 0
        %v628 = vsel %vm617, %v616, 0
        %630 = vmatprep.subr.bf16.mxu0 %v594
        %631 = vmatpush1.bf16.msra.mxu0 %v593
        %632 = vmatprep.subr.bf16.mxu0 0
        %633 = vmatpush1.bf16.msra.mxu0 0
        %634 = vmatprep.subr.bf16.mxu0 0
        %635 = vmatpush1.bf16.msra.mxu0 0
        %636 = vmatprep.subr.bf16.mxu0 0
        %637 = vmatpush1.bf16.msra.mxu0 0
        %638 = vmatprep.subr.bf16.mxu0 0
        %639 = vmatpush1.bf16.msra.mxu0 0
        %640 = vmatprep.subr.bf16.mxu0 0
        %641 = vmatpush1.bf16.msra.mxu0 0
        %642 = vmatprep.subr.bf16.mxu0 0
        %643 = vmatpush1.bf16.msra.mxu0 0
        %644 = vmatprep.subr.bf16.mxu0 0
        %645 = vmatpush1.bf16.msra.mxu0 0
        %646 = vmatprep.subr.bf16.mxu0 0
        %647 = vmatpush1.bf16.msra.mxu0 0
        %648 = vmatprep.subr.bf16.mxu0 0
        %649 = vmatpush1.bf16.msra.mxu0 0
        %650 = vmatprep.subr.bf16.mxu0 0
        %651 = vmatpush1.bf16.msra.mxu0 0
        %652 = vmatprep.subr.bf16.mxu0 0
        %653 = vmatpush1.bf16.msra.mxu0 0
        %654 = vmatprep.subr.bf16.mxu0 0
        %655 = vmatpush1.bf16.msra.mxu0 0
        %656 = vmatprep.subr.bf16.mxu0 0
        %657 = vmatpush1.bf16.msra.mxu0 0
        %658 = vmatprep.subr.bf16.mxu0 0
        %659 = vmatpush1.bf16.msra.mxu0 0
        %660 = vmatprep.subr.bf16.mxu0 0
        %661 = vmatpush1.bf16.msra.mxu0 0
        %662 = vmatprep.mubr.bf16.mxu0 0
        %663 = vmatmul.mubr.bf16.gmra.mrb[0].mxu0 %v619
        %v664 = vpop.f32.mrb[0].mxu0
        %v665 = vadd.f32 0.0, %v664
        %v666 = vpop.f32.mrb[0].mxu0
        %v667 = vadd.f32 0.0, %v666
        %v668 = vpop.f32.mrb[0].mxu0
        %v669 = vadd.f32 0.0, %v668
        %v670 = vpop.f32.mrb[0].mxu0
        %v671 = vadd.f32 0.0, %v670
        %672 = vmatprep.mubr.bf16.mxu0 0
        %673 = vmatmul.mubr.bf16.gmra.mrb[0].mxu0 %v622
        %v674 = vpop.f32.mrb[0].mxu0
        %v675 = vadd.f32 0.0, %v674
        %v676 = vpop.f32.mrb[0].mxu0
        %v677 = vadd.f32 0.0, %v676
        %v678 = vpop.f32.mrb[0].mxu0
        %v679 = vadd.f32 0.0, %v678
        %v680 = vpop.f32.mrb[0].mxu0
        %v681 = vadd.f32 0.0, %v680
        %682 = vmatprep.mubr.bf16.mxu0 0
        %683 = vmatmul.mubr.bf16.gmra.mrb[0].mxu0 %v625
        %v684 = vpop.f32.mrb[0].mxu0
        %v685 = vadd.f32 0.0, %v684
        %v686 = vpop.f32.mrb[0].mxu0
        %v687 = vadd.f32 0.0, %v686
        %v688 = vpop.f32.mrb[0].mxu0
        %v689 = vadd.f32 0.0, %v688
        %v690 = vpop.f32.mrb[0].mxu0
        %v691 = vadd.f32 0.0, %v690
        %692 = vmatprep.mubr.bf16.mxu0 0
        %693 = vmatmul.mubr.bf16.gmra.mrb[0].mxu0 %v628
        %v694 = vpop.f32.mrb[0].mxu0
        %v695 = vadd.f32 0.0, %v694
        %v696 = vpop.f32.mrb[0].mxu0
        %v697 = vadd.f32 0.0, %v696
        %v698 = vpop.f32.mrb[0].mxu0
        %v699 = vadd.f32 0.0, %v698
        %v700 = vpop.f32.mrb[0].mxu0
        %v701 = vadd.f32 0.0, %v700
        %702 = vdwg.mxu0
        %703 = vmatprep.subr.bf16.mxu0 %v596
        %704 = vmatpush1.bf16.msra.mxu0 %v595
        %705 = vmatprep.subr.bf16.mxu0 0
        %706 = vmatpush1.bf16.msra.mxu0 0
        %707 = vmatprep.subr.bf16.mxu0 0
        %708 = vmatpush1.bf16.msra.mxu0 0
        %709 = vmatprep.subr.bf16.mxu0 0
        %710 = vmatpush1.bf16.msra.mxu0 0
        %711 = vmatprep.subr.bf16.mxu0 0
        %712 = vmatpush1.bf16.msra.mxu0 0
        %713 = vmatprep.subr.bf16.mxu0 0
        %714 = vmatpush1.bf16.msra.mxu0 0
        %715 = vmatprep.subr.bf16.mxu0 0
        %716 = vmatpush1.bf16.msra.mxu0 0
        %717 = vmatprep.subr.bf16.mxu0 0
        %718 = vmatpush1.bf16.msra.mxu0 0
        %719 = vmatprep.subr.bf16.mxu0 0
        %720 = vmatpush1.bf16.msra.mxu0 0
        %721 = vmatprep.subr.bf16.mxu0 0
        %722 = vmatpush1.bf16.msra.mxu0 0
        %723 = vmatprep.subr.bf16.mxu0 0
        %724 = vmatpush1.bf16.msra.mxu0 0
        %725 = vmatprep.subr.bf16.mxu0 0
        %726 = vmatpush1.bf16.msra.mxu0 0
        %727 = vmatprep.subr.bf16.mxu0 0
        %728 = vmatpush1.bf16.msra.mxu0 0
        %729 = vmatprep.subr.bf16.mxu0 0
        %730 = vmatpush1.bf16.msra.mxu0 0
        %731 = vmatprep.subr.bf16.mxu0 0
        %732 = vmatpush1.bf16.msra.mxu0 0
        %733 = vmatprep.subr.bf16.mxu0 0
        %734 = vmatpush1.bf16.msra.mxu0 0
        %735 = vmatprep.mubr.bf16.mxu0 0
        %736 = vmatmul.mubr.bf16.gmra.mrb[0].mxu0 %v619
        %v737 = vpop.f32.mrb[0].mxu0
        %v738 = vadd.f32 0.0, %v737
        %v739 = vpop.f32.mrb[0].mxu0
        %v740 = vadd.f32 0.0, %v739
        %v741 = vpop.f32.mrb[0].mxu0
        %v742 = vadd.f32 0.0, %v741
        %v743 = vpop.f32.mrb[0].mxu0
        %v744 = vadd.f32 0.0, %v743
        %745 = vmatprep.mubr.bf16.mxu0 0
        %746 = vmatmul.mubr.bf16.gmra.mrb[0].mxu0 %v622
        %v747 = vpop.f32.mrb[0].mxu0
        %v748 = vadd.f32 0.0, %v747
        %v749 = vpop.f32.mrb[0].mxu0
        %v750 = vadd.f32 0.0, %v749
        %v751 = vpop.f32.mrb[0].mxu0
        %v752 = vadd.f32 0.0, %v751
        %v753 = vpop.f32.mrb[0].mxu0
        %v754 = vadd.f32 0.0, %v753
        %755 = vmatprep.mubr.bf16.mxu0 0
        %756 = vmatmul.mubr.bf16.gmra.mrb[0].mxu0 %v625
        %v757 = vpop.f32.mrb[0].mxu0
        %v758 = vadd.f32 0.0, %v757
        %v759 = vpop.f32.mrb[0].mxu0
        %v760 = vadd.f32 0.0, %v759
        %v761 = vpop.f32.mrb[0].mxu0
        %v762 = vadd.f32 0.0, %v761
        %v763 = vpop.f32.mrb[0].mxu0
        %v764 = vadd.f32 0.0, %v763
        %765 = vmatprep.mubr.bf16.mxu0 0
        %766 = vmatmul.mubr.bf16.gmra.mrb[0].mxu0 %v628
        %v767 = vpop.f32.mrb[0].mxu0
        %v768 = vadd.f32 0.0, %v767
        %v769 = vpop.f32.mrb[0].mxu0
        %v770 = vadd.f32 0.0, %v769
        %v771 = vpop.f32.mrb[0].mxu0
        %v772 = vadd.f32 0.0, %v771
        %v773 = vpop.f32.mrb[0].mxu0
        %v774 = vadd.f32 0.0, %v773
        %775 = vdwg.mxu0
        %v776 = vmul.f32 %v665, %v577
        %v777 = vmul.f32 %v667, %v578
        %v778 = vmul.f32 %v738, %v579
        %v779 = vmul.f32 %v740, %v580
        %v780 = vmul.f32 %v669, %v581
        %v781 = vmul.f32 %v671, %v582
        %v782 = vmul.f32 %v742, %v583
        %v783 = vmul.f32 %v744, %v584
        %v784 = vmul.f32 %v675, %v577
        %v785 = vmul.f32 %v677, %v578
        %v786 = vmul.f32 %v748, %v579
        %v787 = vmul.f32 %v750, %v580
        %v788 = vmul.f32 %v679, %v581
        %v789 = vmul.f32 %v681, %v582
        %v790 = vmul.f32 %v752, %v583
        %v791 = vmul.f32 %v754, %v584
        %v792 = vmul.f32 %v685, %v577
        %v793 = vmul.f32 %v687, %v578
        %v794 = vmul.f32 %v758, %v579
        %v795 = vmul.f32 %v760, %v580
        %v796 = vmul.f32 %v689, %v581
        %v797 = vmul.f32 %v691, %v582
        %v798 = vmul.f32 %v762, %v583
        %v799 = vmul.f32 %v764, %v584
        %v800 = vmul.f32 %v695, %v577
        %v801 = vmul.f32 %v697, %v578
        %v802 = vmul.f32 %v768, %v579
        %v803 = vmul.f32 %v770, %v580
        %v804 = vmul.f32 %v699, %v581
        %v805 = vmul.f32 %v701, %v582
        %v806 = vmul.f32 %v772, %v583
        %v807 = vmul.f32 %v774, %v584
        %v808 = vadd.f32 %v776, %v780
        %v809 = vrot.slane %v808, 4
        %v810 = vadd.f32 %v808, %v809
        %v811 = vrot.slane %v810, 2
        %v812 = vadd.f32 %v810, %v811
        %v813 = vrot.slane %v812, 1
        %v814 = vadd.f32 %v812, %v813
        %v815 = vadd.f32 %v777, %v781
        %v816 = vrot.slane %v815, 4
        %v817 = vadd.f32 %v815, %v816
        %v818 = vrot.slane %v817, 2
        %v819 = vadd.f32 %v817, %v818
        %v820 = vrot.slane %v819, 1
        %v821 = vadd.f32 %v819, %v820
        %v822 = vadd.f32 %v778, %v782
        %v823 = vrot.slane %v822, 4
        %v824 = vadd.f32 %v822, %v823
        %v825 = vrot.slane %v824, 2
        %v826 = vadd.f32 %v824, %v825
        %v827 = vrot.slane %v826, 1
        %v828 = vadd.f32 %v826, %v827
        %v829 = vadd.f32 %v779, %v783
        %v830 = vrot.slane %v829, 4
        %v831 = vadd.f32 %v829, %v830
        %v832 = vrot.slane %v831, 2
        %v833 = vadd.f32 %v831, %v832
        %v834 = vrot.slane %v833, 1
        %v835 = vadd.f32 %v833, %v834
        %v836 = vadd.f32 %v784, %v788
        %v837 = vrot.slane %v836, 4
        %v838 = vadd.f32 %v836, %v837
        %v839 = vrot.slane %v838, 2
        %v840 = vadd.f32 %v838, %v839
        %v841 = vrot.slane %v840, 1
        %v842 = vadd.f32 %v840, %v841
        %v843 = vadd.f32 %v785, %v789
        %v844 = vrot.slane %v843, 4
        %v845 = vadd.f32 %v843, %v844
        %v846 = vrot.slane %v845, 2
        %v847 = vadd.f32 %v845, %v846
        %v848 = vrot.slane %v847, 1
        %v849 = vadd.f32 %v847, %v848
        %v850 = vadd.f32 %v786, %v790
        %v851 = vrot.slane %v850, 4
        %v852 = vadd.f32 %v850, %v851
        %v853 = vrot.slane %v852, 2
        %v854 = vadd.f32 %v852, %v853
        %v855 = vrot.slane %v854, 1
        %v856 = vadd.f32 %v854, %v855
        %v857 = vadd.f32 %v787, %v791
        %v858 = vrot.slane %v857, 4
        %v859 = vadd.f32 %v857, %v858
        %v860 = vrot.slane %v859, 2
        %v861 = vadd.f32 %v859, %v860
        %v862 = vrot.slane %v861, 1
        %v863 = vadd.f32 %v861, %v862
        %v864 = vadd.f32 %v792, %v796
        %v865 = vrot.slane %v864, 4
        %v866 = vadd.f32 %v864, %v865
        %v867 = vrot.slane %v866, 2
        %v868 = vadd.f32 %v866, %v867
        %v869 = vrot.slane %v868, 1
        %v870 = vadd.f32 %v868, %v869
        %v871 = vadd.f32 %v793, %v797
        %v872 = vrot.slane %v871, 4
        %v873 = vadd.f32 %v871, %v872
        %v874 = vrot.slane %v873, 2
        %v875 = vadd.f32 %v873, %v874
        %v876 = vrot.slane %v875, 1
        %v877 = vadd.f32 %v875, %v876
        %v878 = vadd.f32 %v794, %v798
        %v879 = vrot.slane %v878, 4
        %v880 = vadd.f32 %v878, %v879
        %v881 = vrot.slane %v880, 2
        %v882 = vadd.f32 %v880, %v881
        %v883 = vrot.slane %v882, 1
        %v884 = vadd.f32 %v882, %v883
        %v885 = vadd.f32 %v795, %v799
        %v886 = vrot.slane %v885, 4
        %v887 = vadd.f32 %v885, %v886
        %v888 = vrot.slane %v887, 2
        %v889 = vadd.f32 %v887, %v888
        %v890 = vrot.slane %v889, 1
        %v891 = vadd.f32 %v889, %v890
        %v892 = vadd.f32 %v800, %v804
        %v893 = vrot.slane %v892, 4
        %v894 = vadd.f32 %v892, %v893
        %v895 = vrot.slane %v894, 2
        %v896 = vadd.f32 %v894, %v895
        %v897 = vrot.slane %v896, 1
        %v898 = vadd.f32 %v896, %v897
        %v899 = vadd.f32 %v801, %v805
        %v900 = vrot.slane %v899, 4
        %v901 = vadd.f32 %v899, %v900
        %v902 = vrot.slane %v901, 2
        %v903 = vadd.f32 %v901, %v902
        %v904 = vrot.slane %v903, 1
        %v905 = vadd.f32 %v903, %v904
        %v906 = vadd.f32 %v802, %v806
        %v907 = vrot.slane %v906, 4
        %v908 = vadd.f32 %v906, %v907
        %v909 = vrot.slane %v908, 2
        %v910 = vadd.f32 %v908, %v909
        %v911 = vrot.slane %v910, 1
        %v912 = vadd.f32 %v910, %v911
        %v913 = vadd.f32 %v803, %v807
        %v914 = vrot.slane %v913, 4
        %v915 = vadd.f32 %v913, %v914
        %v916 = vrot.slane %v915, 2
        %v917 = vadd.f32 %v915, %v916
        %v918 = vrot.slane %v917, 1
        %v919 = vadd.f32 %v917, %v918
        %v922 = vlaneseq
        %v923 = vshrl.u32 %v922, 7
        %v924 = vsub.s32 2, %v923
        %v925 = vrot.slane %v199, %v924
        %v926 = vlaneseq
        %v927 = vshrl.u32 %v926, 7
        %v928 = vsub.s32 6, %v927
        %v929 = vrot.slane %v199, %v928
        %v930 = vlaneseq
        %v931 = vshrl.u32 %v930, 7
        %v932 = vsub.s32 2, %v931
        %v933 = vrot.slane %v200, %v932
        %v934 = vlaneseq
        %v935 = vshrl.u32 %v934, 7
        %v936 = vsub.s32 6, %v935
        %v937 = vrot.slane %v200, %v936
        %v942 = vlaneseq
        %v943 = vshrl.u32 %v942, 7
        %v944 = vsub.s32 2, %v943
        %v945 = vrot.slane %v925, %v944
        %v946 = vlaneseq
        %v947 = vshrl.u32 %v946, 7
        %v948 = vsub.s32 2, %v947
        %v949 = vrot.slane %v929, %v948
        %v950 = vlaneseq
        %v951 = vshrl.u32 %v950, 7
        %v952 = vsub.s32 2, %v951
        %v953 = vrot.slane %v933, %v952
        %v954 = vlaneseq
        %v955 = vshrl.u32 %v954, 7
        %v956 = vsub.s32 2, %v955
        %v957 = vrot.slane %v937, %v956
        %v958 = vmul.f32 %v814, %v945
        %v959 = vmul.f32 %v821, %v949
        %v960 = vmul.f32 %v828, %v953
        %v961 = vmul.f32 %v835, %v957
        %v962 = vmul.f32 %v842, %v945
        %v963 = vmul.f32 %v849, %v949
        %v964 = vmul.f32 %v856, %v953
        %v965 = vmul.f32 %v863, %v957
        %v966 = vmul.f32 %v870, %v945
        %v967 = vmul.f32 %v877, %v949
        %v968 = vmul.f32 %v884, %v953
        %v969 = vmul.f32 %v891, %v957
        %v970 = vmul.f32 %v898, %v945
        %v971 = vmul.f32 %v905, %v949
        %v972 = vmul.f32 %v912, %v953
        %v973 = vmul.f32 %v919, %v957
        %v974 = vadd.f32 %v958, 0.0
        %v975 = vadd.f32 %v959, 0.0
        %v976 = vadd.f32 %v960, 0.0
        %v977 = vadd.f32 %v961, 0.0
        %v978 = vadd.f32 %v962, 0.0
        %v979 = vadd.f32 %v963, 0.0
        %v980 = vadd.f32 %v964, 0.0
        %v981 = vadd.f32 %v965, 0.0
        %v982 = vadd.f32 %v966, 0.0
        %v983 = vadd.f32 %v967, 0.0
        %v984 = vadd.f32 %v968, 0.0
        %v985 = vadd.f32 %v969, 0.0
        %v986 = vadd.f32 %v970, 0.0
        %v987 = vadd.f32 %v971, 0.0
        %v988 = vadd.f32 %v972, 0.0
        %v989 = vadd.f32 %v973, 0.0
        %s990 = scalar_lea.vmem %s185, 16
        %v991 = vld [vmem:[%s990] sm:$0x77]
        %v992 = vld [vmem:[%s990 + $0x8] sm:$0x77]
        %v993 = vfloor.f32 %v991
        %v994 = vfloor.f32 %v992
        %v995 = vsub.f32 %v991, %v993
        %v996 = vsub.f32 %v992, %v994
        %v999 = vlaneseq
        %v1000 = vshrl.u32 %v999, 7
        %v1001 = vsub.s32 0, %v1000
        %v1002 = vrot.slane %v993, %v1001
        %v1003 = vlaneseq
        %v1004 = vshrl.u32 %v1003, 7
        %v1005 = vsub.s32 4, %v1004
        %v1006 = vrot.slane %v993, %v1005
        %v1007 = vlaneseq
        %v1008 = vshrl.u32 %v1007, 7
        %v1009 = vsub.s32 0, %v1008
        %v1010 = vrot.slane %v994, %v1009
        %v1011 = vlaneseq
        %v1012 = vshrl.u32 %v1011, 7
        %v1013 = vsub.s32 4, %v1012
        %v1014 = vrot.slane %v994, %v1013
        %v1019 = vlaneseq
        %v1020 = vshrl.u32 %v1019, 7
        %v1021 = vsub.s32 0, %v1020
        %v1022 = vrot.slane %v1002, %v1021
        %v1023 = vlaneseq
        %v1024 = vshrl.u32 %v1023, 7
        %v1025 = vsub.s32 0, %v1024
        %v1026 = vrot.slane %v1006, %v1025
        %v1027 = vlaneseq
        %v1028 = vshrl.u32 %v1027, 7
        %v1029 = vsub.s32 0, %v1028
        %v1030 = vrot.slane %v1010, %v1029
        %v1031 = vlaneseq
        %v1032 = vshrl.u32 %v1031, 7
        %v1033 = vsub.s32 0, %v1032
        %v1034 = vrot.slane %v1014, %v1033
        %vm1035 = vcmp.eq.f32.partialorder %v197, %v1022
        %vm1036 = vcmp.eq.f32.partialorder %v197, %v1026
        %vm1037 = vcmp.eq.f32.partialorder %v197, %v1030
        %vm1038 = vcmp.eq.f32.partialorder %v197, %v1034
        %vm1039 = vcmp.eq.f32.partialorder %v198, %v1022
        %vm1040 = vcmp.eq.f32.partialorder %v198, %v1026
        %vm1041 = vcmp.eq.f32.partialorder %v198, %v1030
        %vm1042 = vcmp.eq.f32.partialorder %v198, %v1034
        %v1043 = vsub.f32 1.0, %v995
        %v1044 = vsub.f32 1.0, %v996
        %v1047 = vlaneseq
        %v1048 = vshrl.u32 %v1047, 7
        %v1049 = vsub.s32 0, %v1048
        %v1050 = vrot.slane %v1043, %v1049
        %v1051 = vlaneseq
        %v1052 = vshrl.u32 %v1051, 7
        %v1053 = vsub.s32 4, %v1052
        %v1054 = vrot.slane %v1043, %v1053
        %v1055 = vlaneseq
        %v1056 = vshrl.u32 %v1055, 7
        %v1057 = vsub.s32 0, %v1056
        %v1058 = vrot.slane %v1044, %v1057
        %v1059 = vlaneseq
        %v1060 = vshrl.u32 %v1059, 7
        %v1061 = vsub.s32 4, %v1060
        %v1062 = vrot.slane %v1044, %v1061
        %v1067 = vlaneseq
        %v1068 = vshrl.u32 %v1067, 7
        %v1069 = vsub.s32 0, %v1068
        %v1070 = vrot.slane %v1050, %v1069
        %v1071 = vlaneseq
        %v1072 = vshrl.u32 %v1071, 7
        %v1073 = vsub.s32 0, %v1072
        %v1074 = vrot.slane %v1054, %v1073
        %v1075 = vlaneseq
        %v1076 = vshrl.u32 %v1075, 7
        %v1077 = vsub.s32 0, %v1076
        %v1078 = vrot.slane %v1058, %v1077
        %v1079 = vlaneseq
        %v1080 = vshrl.u32 %v1079, 7
        %v1081 = vsub.s32 0, %v1080
        %v1082 = vrot.slane %v1062, %v1081
        %v1083 = vsel %vm1035, %v1070, 0.0
        %v1084 = vsel %vm1036, %v1074, 0.0
        %v1085 = vsel %vm1037, %v1078, 0.0
        %v1086 = vsel %vm1038, %v1082, 0.0
        %v1087 = vsel %vm1039, %v1070, 0.0
        %v1088 = vsel %vm1040, %v1074, 0.0
        %v1089 = vsel %vm1041, %v1078, 0.0
        %v1090 = vsel %vm1042, %v1082, 0.0
        %v1091 = vadd.f32 %v993, 1.0
        %v1092 = vadd.f32 %v994, 1.0
        %v1095 = vlaneseq
        %v1096 = vshrl.u32 %v1095, 7
        %v1097 = vsub.s32 0, %v1096
        %v1098 = vrot.slane %v1091, %v1097
        %v1099 = vlaneseq
        %v1100 = vshrl.u32 %v1099, 7
        %v1101 = vsub.s32 4, %v1100
        %v1102 = vrot.slane %v1091, %v1101
        %v1103 = vlaneseq
        %v1104 = vshrl.u32 %v1103, 7
        %v1105 = vsub.s32 0, %v1104
        %v1106 = vrot.slane %v1092, %v1105
        %v1107 = vlaneseq
        %v1108 = vshrl.u32 %v1107, 7
        %v1109 = vsub.s32 4, %v1108
        %v1110 = vrot.slane %v1092, %v1109
        %v1115 = vlaneseq
        %v1116 = vshrl.u32 %v1115, 7
        %v1117 = vsub.s32 0, %v1116
        %v1118 = vrot.slane %v1098, %v1117
        %v1119 = vlaneseq
        %v1120 = vshrl.u32 %v1119, 7
        %v1121 = vsub.s32 0, %v1120
        %v1122 = vrot.slane %v1102, %v1121
        %v1123 = vlaneseq
        %v1124 = vshrl.u32 %v1123, 7
        %v1125 = vsub.s32 0, %v1124
        %v1126 = vrot.slane %v1106, %v1125
        %v1127 = vlaneseq
        %v1128 = vshrl.u32 %v1127, 7
        %v1129 = vsub.s32 0, %v1128
        %v1130 = vrot.slane %v1110, %v1129
        %vm1131 = vcmp.eq.f32.partialorder %v197, %v1118
        %vm1132 = vcmp.eq.f32.partialorder %v197, %v1122
        %vm1133 = vcmp.eq.f32.partialorder %v197, %v1126
        %vm1134 = vcmp.eq.f32.partialorder %v197, %v1130
        %vm1135 = vcmp.eq.f32.partialorder %v198, %v1118
        %vm1136 = vcmp.eq.f32.partialorder %v198, %v1122
        %vm1137 = vcmp.eq.f32.partialorder %v198, %v1126
        %vm1138 = vcmp.eq.f32.partialorder %v198, %v1130
        %v1141 = vlaneseq
        %v1142 = vshrl.u32 %v1141, 7
        %v1143 = vsub.s32 0, %v1142
        %v1144 = vrot.slane %v995, %v1143
        %v1145 = vlaneseq
        %v1146 = vshrl.u32 %v1145, 7
        %v1147 = vsub.s32 4, %v1146
        %v1148 = vrot.slane %v995, %v1147
        %v1149 = vlaneseq
        %v1150 = vshrl.u32 %v1149, 7
        %v1151 = vsub.s32 0, %v1150
        %v1152 = vrot.slane %v996, %v1151
        %v1153 = vlaneseq
        %v1154 = vshrl.u32 %v1153, 7
        %v1155 = vsub.s32 4, %v1154
        %v1156 = vrot.slane %v996, %v1155
        %v1161 = vlaneseq
        %v1162 = vshrl.u32 %v1161, 7
        %v1163 = vsub.s32 0, %v1162
        %v1164 = vrot.slane %v1144, %v1163
        %v1165 = vlaneseq
        %v1166 = vshrl.u32 %v1165, 7
        %v1167 = vsub.s32 0, %v1166
        %v1168 = vrot.slane %v1148, %v1167
        %v1169 = vlaneseq
        %v1170 = vshrl.u32 %v1169, 7
        %v1171 = vsub.s32 0, %v1170
        %v1172 = vrot.slane %v1152, %v1171
        %v1173 = vlaneseq
        %v1174 = vshrl.u32 %v1173, 7
        %v1175 = vsub.s32 0, %v1174
        %v1176 = vrot.slane %v1156, %v1175
        %v1177 = vsel %vm1131, %v1164, 0.0
        %v1178 = vsel %vm1132, %v1168, 0.0
        %v1179 = vsel %vm1133, %v1172, 0.0
        %v1180 = vsel %vm1134, %v1176, 0.0
        %v1181 = vsel %vm1135, %v1164, 0.0
        %v1182 = vsel %vm1136, %v1168, 0.0
        %v1183 = vsel %vm1137, %v1172, 0.0
        %v1184 = vsel %vm1138, %v1176, 0.0
        %v1185 = vadd.f32 %v1083, %v1177
        %v1186 = vadd.f32 %v1084, %v1178
        %v1187 = vadd.f32 %v1085, %v1179
        %v1188 = vadd.f32 %v1086, %v1180
        %v1189 = vadd.f32 %v1087, %v1181
        %v1190 = vadd.f32 %v1088, %v1182
        %v1191 = vadd.f32 %v1089, %v1183
        %v1192 = vadd.f32 %v1090, %v1184
        %v1193 = vlaneseq
        %v1194 = vshrl.u32 %v1193, 7
        %v1195 = vsub.s32 1, %v1194
        %v1196 = vrot.slane %v993, %v1195
        %v1197 = vlaneseq
        %v1198 = vshrl.u32 %v1197, 7
        %v1199 = vsub.s32 5, %v1198
        %v1200 = vrot.slane %v993, %v1199
        %v1201 = vlaneseq
        %v1202 = vshrl.u32 %v1201, 7
        %v1203 = vsub.s32 1, %v1202
        %v1204 = vrot.slane %v994, %v1203
        %v1205 = vlaneseq
        %v1206 = vshrl.u32 %v1205, 7
        %v1207 = vsub.s32 5, %v1206
        %v1208 = vrot.slane %v994, %v1207
        %v1213 = vlaneseq
        %v1214 = vshrl.u32 %v1213, 7
        %v1215 = vsub.s32 1, %v1214
        %v1216 = vrot.slane %v1196, %v1215
        %v1217 = vlaneseq
        %v1218 = vshrl.u32 %v1217, 7
        %v1219 = vsub.s32 1, %v1218
        %v1220 = vrot.slane %v1200, %v1219
        %v1221 = vlaneseq
        %v1222 = vshrl.u32 %v1221, 7
        %v1223 = vsub.s32 1, %v1222
        %v1224 = vrot.slane %v1204, %v1223
        %v1225 = vlaneseq
        %v1226 = vshrl.u32 %v1225, 7
        %v1227 = vsub.s32 1, %v1226
        %v1228 = vrot.slane %v1208, %v1227
        %vm1229 = vcmp.eq.f32.partialorder %v197, %v1216
        %vm1230 = vcmp.eq.f32.partialorder %v197, %v1220
        %vm1231 = vcmp.eq.f32.partialorder %v197, %v1224
        %vm1232 = vcmp.eq.f32.partialorder %v197, %v1228
        %vm1233 = vcmp.eq.f32.partialorder %v198, %v1216
        %vm1234 = vcmp.eq.f32.partialorder %v198, %v1220
        %vm1235 = vcmp.eq.f32.partialorder %v198, %v1224
        %vm1236 = vcmp.eq.f32.partialorder %v198, %v1228
        %v1237 = vlaneseq
        %v1238 = vshrl.u32 %v1237, 7
        %v1239 = vsub.s32 1, %v1238
        %v1240 = vrot.slane %v1043, %v1239
        %v1241 = vlaneseq
        %v1242 = vshrl.u32 %v1241, 7
        %v1243 = vsub.s32 5, %v1242
        %v1244 = vrot.slane %v1043, %v1243
        %v1245 = vlaneseq
        %v1246 = vshrl.u32 %v1245, 7
        %v1247 = vsub.s32 1, %v1246
        %v1248 = vrot.slane %v1044, %v1247
        %v1249 = vlaneseq
        %v1250 = vshrl.u32 %v1249, 7
        %v1251 = vsub.s32 5, %v1250
        %v1252 = vrot.slane %v1044, %v1251
        %v1257 = vlaneseq
        %v1258 = vshrl.u32 %v1257, 7
        %v1259 = vsub.s32 1, %v1258
        %v1260 = vrot.slane %v1240, %v1259
        %v1261 = vlaneseq
        %v1262 = vshrl.u32 %v1261, 7
        %v1263 = vsub.s32 1, %v1262
        %v1264 = vrot.slane %v1244, %v1263
        %v1265 = vlaneseq
        %v1266 = vshrl.u32 %v1265, 7
        %v1267 = vsub.s32 1, %v1266
        %v1268 = vrot.slane %v1248, %v1267
        %v1269 = vlaneseq
        %v1270 = vshrl.u32 %v1269, 7
        %v1271 = vsub.s32 1, %v1270
        %v1272 = vrot.slane %v1252, %v1271
        %v1273 = vsel %vm1229, %v1260, 0.0
        %v1274 = vsel %vm1230, %v1264, 0.0
        %v1275 = vsel %vm1231, %v1268, 0.0
        %v1276 = vsel %vm1232, %v1272, 0.0
        %v1277 = vsel %vm1233, %v1260, 0.0
        %v1278 = vsel %vm1234, %v1264, 0.0
        %v1279 = vsel %vm1235, %v1268, 0.0
        %v1280 = vsel %vm1236, %v1272, 0.0
        %v1281 = vlaneseq
        %v1282 = vshrl.u32 %v1281, 7
        %v1283 = vsub.s32 1, %v1282
        %v1284 = vrot.slane %v1091, %v1283
        %v1285 = vlaneseq
        %v1286 = vshrl.u32 %v1285, 7
        %v1287 = vsub.s32 5, %v1286
        %v1288 = vrot.slane %v1091, %v1287
        %v1289 = vlaneseq
        %v1290 = vshrl.u32 %v1289, 7
        %v1291 = vsub.s32 1, %v1290
        %v1292 = vrot.slane %v1092, %v1291
        %v1293 = vlaneseq
        %v1294 = vshrl.u32 %v1293, 7
        %v1295 = vsub.s32 5, %v1294
        %v1296 = vrot.slane %v1092, %v1295
        %v1301 = vlaneseq
        %v1302 = vshrl.u32 %v1301, 7
        %v1303 = vsub.s32 1, %v1302
        %v1304 = vrot.slane %v1284, %v1303
        %v1305 = vlaneseq
        %v1306 = vshrl.u32 %v1305, 7
        %v1307 = vsub.s32 1, %v1306
        %v1308 = vrot.slane %v1288, %v1307
        %v1309 = vlaneseq
        %v1310 = vshrl.u32 %v1309, 7
        %v1311 = vsub.s32 1, %v1310
        %v1312 = vrot.slane %v1292, %v1311
        %v1313 = vlaneseq
        %v1314 = vshrl.u32 %v1313, 7
        %v1315 = vsub.s32 1, %v1314
        %v1316 = vrot.slane %v1296, %v1315
        %vm1317 = vcmp.eq.f32.partialorder %v197, %v1304
        %vm1318 = vcmp.eq.f32.partialorder %v197, %v1308
        %vm1319 = vcmp.eq.f32.partialorder %v197, %v1312
        %vm1320 = vcmp.eq.f32.partialorder %v197, %v1316
        %vm1321 = vcmp.eq.f32.partialorder %v198, %v1304
        %vm1322 = vcmp.eq.f32.partialorder %v198, %v1308
        %vm1323 = vcmp.eq.f32.partialorder %v198, %v1312
        %vm1324 = vcmp.eq.f32.partialorder %v198, %v1316
        %v1325 = vlaneseq
        %v1326 = vshrl.u32 %v1325, 7
        %v1327 = vsub.s32 1, %v1326
        %v1328 = vrot.slane %v995, %v1327
        %v1329 = vlaneseq
        %v1330 = vshrl.u32 %v1329, 7
        %v1331 = vsub.s32 5, %v1330
        %v1332 = vrot.slane %v995, %v1331
        %v1333 = vlaneseq
        %v1334 = vshrl.u32 %v1333, 7
        %v1335 = vsub.s32 1, %v1334
        %v1336 = vrot.slane %v996, %v1335
        %v1337 = vlaneseq
        %v1338 = vshrl.u32 %v1337, 7
        %v1339 = vsub.s32 5, %v1338
        %v1340 = vrot.slane %v996, %v1339
        %v1345 = vlaneseq
        %v1346 = vshrl.u32 %v1345, 7
        %v1347 = vsub.s32 1, %v1346
        %v1348 = vrot.slane %v1328, %v1347
        %v1349 = vlaneseq
        %v1350 = vshrl.u32 %v1349, 7
        %v1351 = vsub.s32 1, %v1350
        %v1352 = vrot.slane %v1332, %v1351
        %v1353 = vlaneseq
        %v1354 = vshrl.u32 %v1353, 7
        %v1355 = vsub.s32 1, %v1354
        %v1356 = vrot.slane %v1336, %v1355
        %v1357 = vlaneseq
        %v1358 = vshrl.u32 %v1357, 7
        %v1359 = vsub.s32 1, %v1358
        %v1360 = vrot.slane %v1340, %v1359
        %v1361 = vsel %vm1317, %v1348, 0.0
        %v1362 = vsel %vm1318, %v1352, 0.0
        %v1363 = vsel %vm1319, %v1356, 0.0
        %v1364 = vsel %vm1320, %v1360, 0.0
        %v1365 = vsel %vm1321, %v1348, 0.0
        %v1366 = vsel %vm1322, %v1352, 0.0
        %v1367 = vsel %vm1323, %v1356, 0.0
        %v1368 = vsel %vm1324, %v1360, 0.0
        %v1369 = vadd.f32 %v1273, %v1361
        %v1370 = vadd.f32 %v1274, %v1362
        %v1371 = vadd.f32 %v1275, %v1363
        %v1372 = vadd.f32 %v1276, %v1364
        %v1373 = vadd.f32 %v1277, %v1365
        %v1374 = vadd.f32 %v1278, %v1366
        %v1375 = vadd.f32 %v1279, %v1367
        %v1376 = vadd.f32 %v1280, %v1368
        %s1377 = scalar_lea.vmem %s191, 32
        %v1378 = vld [vmem:[%s1377] sm:$0xf]
        %v1379 = vld [vmem:[%s1377 + $0x4] sm:$0xf]
        %v1380 = vld [vmem:[%s1377 + $0x8] sm:$0xf]
        %v1381 = vld [vmem:[%s1377 + $0xc] sm:$0xf]
        %v1382 = vld [vmem:[%s1377 + $0x10] sm:$0xf]
        %v1383 = vld [vmem:[%s1377 + $0x14] sm:$0xf]
        %v1384 = vld [vmem:[%s1377 + $0x18] sm:$0xf]
        %v1385 = vld [vmem:[%s1377 + $0x1c] sm:$0xf]
        %v1386 = vpack.c.bf16 %v1189, %v1185
        %v1387 = vpack.c.bf16 %v1190, %v1186
        %v1388 = vpack.c.bf16 %v1191, %v1187
        %v1389 = vpack.c.bf16 %v1192, %v1188
        %v1398 = vunpack.c.l.b16 %v1378
        %v1399 = vunpack.c.l.b16 %v1379
        %v1400 = vunpack.c.l.b16 %v1380
        %v1401 = vunpack.c.l.b16 %v1381
        %v1402 = vunpack.c.l.b16 %v1382
        %v1403 = vunpack.c.l.b16 %v1383
        %v1404 = vunpack.c.l.b16 %v1384
        %v1405 = vunpack.c.l.b16 %v1385
        %v1406 = vpack.c.b16 %v1399, %v1398
        %v1407 = vpack.c.b16 %v1401, %v1400
        %v1408 = vpack.c.b16 %v1403, %v1402
        %v1409 = vpack.c.b16 %v1405, %v1404
        %v1411 = vsel %vm617, %v1406, 0
        %v1414 = vsel %vm617, %v1407, 0
        %v1417 = vsel %vm617, %v1408, 0
        %v1420 = vsel %vm617, %v1409, 0
        %1422 = vmatprep.subr.bf16.mxu0 %v1387
        %1423 = vmatpush1.bf16.msra.mxu0 %v1386
        %1424 = vmatprep.subr.bf16.mxu0 0
        %1425 = vmatpush1.bf16.msra.mxu0 0
        %1426 = vmatprep.subr.bf16.mxu0 0
        %1427 = vmatpush1.bf16.msra.mxu0 0
        %1428 = vmatprep.subr.bf16.mxu0 0
        %1429 = vmatpush1.bf16.msra.mxu0 0
        %1430 = vmatprep.subr.bf16.mxu0 0
        %1431 = vmatpush1.bf16.msra.mxu0 0
        %1432 = vmatprep.subr.bf16.mxu0 0
        %1433 = vmatpush1.bf16.msra.mxu0 0
        %1434 = vmatprep.subr.bf16.mxu0 0
        %1435 = vmatpush1.bf16.msra.mxu0 0
        %1436 = vmatprep.subr.bf16.mxu0 0
        %1437 = vmatpush1.bf16.msra.mxu0 0
        %1438 = vmatprep.subr.bf16.mxu0 0
        %1439 = vmatpush1.bf16.msra.mxu0 0
        %1440 = vmatprep.subr.bf16.mxu0 0
        %1441 = vmatpush1.bf16.msra.mxu0 0
        %1442 = vmatprep.subr.bf16.mxu0 0
        %1443 = vmatpush1.bf16.msra.mxu0 0
        %1444 = vmatprep.subr.bf16.mxu0 0
        %1445 = vmatpush1.bf16.msra.mxu0 0
        %1446 = vmatprep.subr.bf16.mxu0 0
        %1447 = vmatpush1.bf16.msra.mxu0 0
        %1448 = vmatprep.subr.bf16.mxu0 0
        %1449 = vmatpush1.bf16.msra.mxu0 0
        %1450 = vmatprep.subr.bf16.mxu0 0
        %1451 = vmatpush1.bf16.msra.mxu0 0
        %1452 = vmatprep.subr.bf16.mxu0 0
        %1453 = vmatpush1.bf16.msra.mxu0 0
        %1454 = vmatprep.mubr.bf16.mxu0 0
        %1455 = vmatmul.mubr.bf16.gmra.mrb[0].mxu0 %v1411
        %v1456 = vpop.f32.mrb[0].mxu0
        %v1457 = vadd.f32 0.0, %v1456
        %v1458 = vpop.f32.mrb[0].mxu0
        %v1459 = vadd.f32 0.0, %v1458
        %v1460 = vpop.f32.mrb[0].mxu0
        %v1461 = vadd.f32 0.0, %v1460
        %v1462 = vpop.f32.mrb[0].mxu0
        %v1463 = vadd.f32 0.0, %v1462
        %1464 = vmatprep.mubr.bf16.mxu0 0
        %1465 = vmatmul.mubr.bf16.gmra.mrb[0].mxu0 %v1414
        %v1466 = vpop.f32.mrb[0].mxu0
        %v1467 = vadd.f32 0.0, %v1466
        %v1468 = vpop.f32.mrb[0].mxu0
        %v1469 = vadd.f32 0.0, %v1468
        %v1470 = vpop.f32.mrb[0].mxu0
        %v1471 = vadd.f32 0.0, %v1470
        %v1472 = vpop.f32.mrb[0].mxu0
        %v1473 = vadd.f32 0.0, %v1472
        %1474 = vmatprep.mubr.bf16.mxu0 0
        %1475 = vmatmul.mubr.bf16.gmra.mrb[0].mxu0 %v1417
        %v1476 = vpop.f32.mrb[0].mxu0
        %v1477 = vadd.f32 0.0, %v1476
        %v1478 = vpop.f32.mrb[0].mxu0
        %v1479 = vadd.f32 0.0, %v1478
        %v1480 = vpop.f32.mrb[0].mxu0
        %v1481 = vadd.f32 0.0, %v1480
        %v1482 = vpop.f32.mrb[0].mxu0
        %v1483 = vadd.f32 0.0, %v1482
        %1484 = vmatprep.mubr.bf16.mxu0 0
        %1485 = vmatmul.mubr.bf16.gmra.mrb[0].mxu0 %v1420
        %v1486 = vpop.f32.mrb[0].mxu0
        %v1487 = vadd.f32 0.0, %v1486
        %v1488 = vpop.f32.mrb[0].mxu0
        %v1489 = vadd.f32 0.0, %v1488
        %v1490 = vpop.f32.mrb[0].mxu0
        %v1491 = vadd.f32 0.0, %v1490
        %v1492 = vpop.f32.mrb[0].mxu0
        %v1493 = vadd.f32 0.0, %v1492
        %1494 = vdwg.mxu0
        %1495 = vmatprep.subr.bf16.mxu0 %v1389
        %1496 = vmatpush1.bf16.msra.mxu0 %v1388
        %1497 = vmatprep.subr.bf16.mxu0 0
        %1498 = vmatpush1.bf16.msra.mxu0 0
        %1499 = vmatprep.subr.bf16.mxu0 0
        %1500 = vmatpush1.bf16.msra.mxu0 0
        %1501 = vmatprep.subr.bf16.mxu0 0
        %1502 = vmatpush1.bf16.msra.mxu0 0
        %1503 = vmatprep.subr.bf16.mxu0 0
        %1504 = vmatpush1.bf16.msra.mxu0 0
        %1505 = vmatprep.subr.bf16.mxu0 0
        %1506 = vmatpush1.bf16.msra.mxu0 0
        %1507 = vmatprep.subr.bf16.mxu0 0
        %1508 = vmatpush1.bf16.msra.mxu0 0
        %1509 = vmatprep.subr.bf16.mxu0 0
        %1510 = vmatpush1.bf16.msra.mxu0 0
        %1511 = vmatprep.subr.bf16.mxu0 0
        %1512 = vmatpush1.bf16.msra.mxu0 0
        %1513 = vmatprep.subr.bf16.mxu0 0
        %1514 = vmatpush1.bf16.msra.mxu0 0
        %1515 = vmatprep.subr.bf16.mxu0 0
        %1516 = vmatpush1.bf16.msra.mxu0 0
        %1517 = vmatprep.subr.bf16.mxu0 0
        %1518 = vmatpush1.bf16.msra.mxu0 0
        %1519 = vmatprep.subr.bf16.mxu0 0
        %1520 = vmatpush1.bf16.msra.mxu0 0
        %1521 = vmatprep.subr.bf16.mxu0 0
        %1522 = vmatpush1.bf16.msra.mxu0 0
        %1523 = vmatprep.subr.bf16.mxu0 0
        %1524 = vmatpush1.bf16.msra.mxu0 0
        %1525 = vmatprep.subr.bf16.mxu0 0
        %1526 = vmatpush1.bf16.msra.mxu0 0
        %1527 = vmatprep.mubr.bf16.mxu0 0
        %1528 = vmatmul.mubr.bf16.gmra.mrb[0].mxu0 %v1411
        %v1529 = vpop.f32.mrb[0].mxu0
        %v1530 = vadd.f32 0.0, %v1529
        %v1531 = vpop.f32.mrb[0].mxu0
        %v1532 = vadd.f32 0.0, %v1531
        %v1533 = vpop.f32.mrb[0].mxu0
        %v1534 = vadd.f32 0.0, %v1533
        %v1535 = vpop.f32.mrb[0].mxu0
        %v1536 = vadd.f32 0.0, %v1535
        %1537 = vmatprep.mubr.bf16.mxu0 0
        %1538 = vmatmul.mubr.bf16.gmra.mrb[0].mxu0 %v1414
        %v1539 = vpop.f32.mrb[0].mxu0
        %v1540 = vadd.f32 0.0, %v1539
        %v1541 = vpop.f32.mrb[0].mxu0
        %v1542 = vadd.f32 0.0, %v1541
        %v1543 = vpop.f32.mrb[0].mxu0
        %v1544 = vadd.f32 0.0, %v1543
        %v1545 = vpop.f32.mrb[0].mxu0
        %v1546 = vadd.f32 0.0, %v1545
        %1547 = vmatprep.mubr.bf16.mxu0 0
        %1548 = vmatmul.mubr.bf16.gmra.mrb[0].mxu0 %v1417
        %v1549 = vpop.f32.mrb[0].mxu0
        %v1550 = vadd.f32 0.0, %v1549
        %v1551 = vpop.f32.mrb[0].mxu0
        %v1552 = vadd.f32 0.0, %v1551
        %v1553 = vpop.f32.mrb[0].mxu0
        %v1554 = vadd.f32 0.0, %v1553
        %v1555 = vpop.f32.mrb[0].mxu0
        %v1556 = vadd.f32 0.0, %v1555
        %1557 = vmatprep.mubr.bf16.mxu0 0
        %1558 = vmatmul.mubr.bf16.gmra.mrb[0].mxu0 %v1420
        %v1559 = vpop.f32.mrb[0].mxu0
        %v1560 = vadd.f32 0.0, %v1559
        %v1561 = vpop.f32.mrb[0].mxu0
        %v1562 = vadd.f32 0.0, %v1561
        %v1563 = vpop.f32.mrb[0].mxu0
        %v1564 = vadd.f32 0.0, %v1563
        %v1565 = vpop.f32.mrb[0].mxu0
        %v1566 = vadd.f32 0.0, %v1565
        %1567 = vdwg.mxu0
        %v1568 = vmul.f32 %v1457, %v1369
        %v1569 = vmul.f32 %v1459, %v1370
        %v1570 = vmul.f32 %v1530, %v1371
        %v1571 = vmul.f32 %v1532, %v1372
        %v1572 = vmul.f32 %v1461, %v1373
        %v1573 = vmul.f32 %v1463, %v1374
        %v1574 = vmul.f32 %v1534, %v1375
        %v1575 = vmul.f32 %v1536, %v1376
        %v1576 = vmul.f32 %v1467, %v1369
        %v1577 = vmul.f32 %v1469, %v1370
        %v1578 = vmul.f32 %v1540, %v1371
        %v1579 = vmul.f32 %v1542, %v1372
        %v1580 = vmul.f32 %v1471, %v1373
        %v1581 = vmul.f32 %v1473, %v1374
        %v1582 = vmul.f32 %v1544, %v1375
        %v1583 = vmul.f32 %v1546, %v1376
        %v1584 = vmul.f32 %v1477, %v1369
        %v1585 = vmul.f32 %v1479, %v1370
        %v1586 = vmul.f32 %v1550, %v1371
        %v1587 = vmul.f32 %v1552, %v1372
        %v1588 = vmul.f32 %v1481, %v1373
        %v1589 = vmul.f32 %v1483, %v1374
        %v1590 = vmul.f32 %v1554, %v1375
        %v1591 = vmul.f32 %v1556, %v1376
        %v1592 = vmul.f32 %v1487, %v1369
        %v1593 = vmul.f32 %v1489, %v1370
        %v1594 = vmul.f32 %v1560, %v1371
        %v1595 = vmul.f32 %v1562, %v1372
        %v1596 = vmul.f32 %v1491, %v1373
        %v1597 = vmul.f32 %v1493, %v1374
        %v1598 = vmul.f32 %v1564, %v1375
        %v1599 = vmul.f32 %v1566, %v1376
        %v1600 = vadd.f32 %v1568, %v1572
        %v1601 = vrot.slane %v1600, 4
        %v1602 = vadd.f32 %v1600, %v1601
        %v1603 = vrot.slane %v1602, 2
        %v1604 = vadd.f32 %v1602, %v1603
        %v1605 = vrot.slane %v1604, 1
        %v1606 = vadd.f32 %v1604, %v1605
        %v1607 = vadd.f32 %v1569, %v1573
        %v1608 = vrot.slane %v1607, 4
        %v1609 = vadd.f32 %v1607, %v1608
        %v1610 = vrot.slane %v1609, 2
        %v1611 = vadd.f32 %v1609, %v1610
        %v1612 = vrot.slane %v1611, 1
        %v1613 = vadd.f32 %v1611, %v1612
        %v1614 = vadd.f32 %v1570, %v1574
        %v1615 = vrot.slane %v1614, 4
        %v1616 = vadd.f32 %v1614, %v1615
        %v1617 = vrot.slane %v1616, 2
        %v1618 = vadd.f32 %v1616, %v1617
        %v1619 = vrot.slane %v1618, 1
        %v1620 = vadd.f32 %v1618, %v1619
        %v1621 = vadd.f32 %v1571, %v1575
        %v1622 = vrot.slane %v1621, 4
        %v1623 = vadd.f32 %v1621, %v1622
        %v1624 = vrot.slane %v1623, 2
        %v1625 = vadd.f32 %v1623, %v1624
        %v1626 = vrot.slane %v1625, 1
        %v1627 = vadd.f32 %v1625, %v1626
        %v1628 = vadd.f32 %v1576, %v1580
        %v1629 = vrot.slane %v1628, 4
        %v1630 = vadd.f32 %v1628, %v1629
        %v1631 = vrot.slane %v1630, 2
        %v1632 = vadd.f32 %v1630, %v1631
        %v1633 = vrot.slane %v1632, 1
        %v1634 = vadd.f32 %v1632, %v1633
        %v1635 = vadd.f32 %v1577, %v1581
        %v1636 = vrot.slane %v1635, 4
        %v1637 = vadd.f32 %v1635, %v1636
        %v1638 = vrot.slane %v1637, 2
        %v1639 = vadd.f32 %v1637, %v1638
        %v1640 = vrot.slane %v1639, 1
        %v1641 = vadd.f32 %v1639, %v1640
        %v1642 = vadd.f32 %v1578, %v1582
        %v1643 = vrot.slane %v1642, 4
        %v1644 = vadd.f32 %v1642, %v1643
        %v1645 = vrot.slane %v1644, 2
        %v1646 = vadd.f32 %v1644, %v1645
        %v1647 = vrot.slane %v1646, 1
        %v1648 = vadd.f32 %v1646, %v1647
        %v1649 = vadd.f32 %v1579, %v1583
        %v1650 = vrot.slane %v1649, 4
        %v1651 = vadd.f32 %v1649, %v1650
        %v1652 = vrot.slane %v1651, 2
        %v1653 = vadd.f32 %v1651, %v1652
        %v1654 = vrot.slane %v1653, 1
        %v1655 = vadd.f32 %v1653, %v1654
        %v1656 = vadd.f32 %v1584, %v1588
        %v1657 = vrot.slane %v1656, 4
        %v1658 = vadd.f32 %v1656, %v1657
        %v1659 = vrot.slane %v1658, 2
        %v1660 = vadd.f32 %v1658, %v1659
        %v1661 = vrot.slane %v1660, 1
        %v1662 = vadd.f32 %v1660, %v1661
        %v1663 = vadd.f32 %v1585, %v1589
        %v1664 = vrot.slane %v1663, 4
        %v1665 = vadd.f32 %v1663, %v1664
        %v1666 = vrot.slane %v1665, 2
        %v1667 = vadd.f32 %v1665, %v1666
        %v1668 = vrot.slane %v1667, 1
        %v1669 = vadd.f32 %v1667, %v1668
        %v1670 = vadd.f32 %v1586, %v1590
        %v1671 = vrot.slane %v1670, 4
        %v1672 = vadd.f32 %v1670, %v1671
        %v1673 = vrot.slane %v1672, 2
        %v1674 = vadd.f32 %v1672, %v1673
        %v1675 = vrot.slane %v1674, 1
        %v1676 = vadd.f32 %v1674, %v1675
        %v1677 = vadd.f32 %v1587, %v1591
        %v1678 = vrot.slane %v1677, 4
        %v1679 = vadd.f32 %v1677, %v1678
        %v1680 = vrot.slane %v1679, 2
        %v1681 = vadd.f32 %v1679, %v1680
        %v1682 = vrot.slane %v1681, 1
        %v1683 = vadd.f32 %v1681, %v1682
        %v1684 = vadd.f32 %v1592, %v1596
        %v1685 = vrot.slane %v1684, 4
        %v1686 = vadd.f32 %v1684, %v1685
        %v1687 = vrot.slane %v1686, 2
        %v1688 = vadd.f32 %v1686, %v1687
        %v1689 = vrot.slane %v1688, 1
        %v1690 = vadd.f32 %v1688, %v1689
        %v1691 = vadd.f32 %v1593, %v1597
        %v1692 = vrot.slane %v1691, 4
        %v1693 = vadd.f32 %v1691, %v1692
        %v1694 = vrot.slane %v1693, 2
        %v1695 = vadd.f32 %v1693, %v1694
        %v1696 = vrot.slane %v1695, 1
        %v1697 = vadd.f32 %v1695, %v1696
        %v1698 = vadd.f32 %v1594, %v1598
        %v1699 = vrot.slane %v1698, 4
        %v1700 = vadd.f32 %v1698, %v1699
        %v1701 = vrot.slane %v1700, 2
        %v1702 = vadd.f32 %v1700, %v1701
        %v1703 = vrot.slane %v1702, 1
        %v1704 = vadd.f32 %v1702, %v1703
        %v1705 = vadd.f32 %v1595, %v1599
        %v1706 = vrot.slane %v1705, 4
        %v1707 = vadd.f32 %v1705, %v1706
        %v1708 = vrot.slane %v1707, 2
        %v1709 = vadd.f32 %v1707, %v1708
        %v1710 = vrot.slane %v1709, 1
        %v1711 = vadd.f32 %v1709, %v1710
        %v1714 = vlaneseq
        %v1715 = vshrl.u32 %v1714, 7
        %v1716 = vsub.s32 2, %v1715
        %v1717 = vrot.slane %v991, %v1716
        %v1718 = vlaneseq
        %v1719 = vshrl.u32 %v1718, 7
        %v1720 = vsub.s32 6, %v1719
        %v1721 = vrot.slane %v991, %v1720
        %v1722 = vlaneseq
        %v1723 = vshrl.u32 %v1722, 7
        %v1724 = vsub.s32 2, %v1723
        %v1725 = vrot.slane %v992, %v1724
        %v1726 = vlaneseq
        %v1727 = vshrl.u32 %v1726, 7
        %v1728 = vsub.s32 6, %v1727
        %v1729 = vrot.slane %v992, %v1728
        %v1734 = vlaneseq
        %v1735 = vshrl.u32 %v1734, 7
        %v1736 = vsub.s32 2, %v1735
        %v1737 = vrot.slane %v1717, %v1736
        %v1738 = vlaneseq
        %v1739 = vshrl.u32 %v1738, 7
        %v1740 = vsub.s32 2, %v1739
        %v1741 = vrot.slane %v1721, %v1740
        %v1742 = vlaneseq
        %v1743 = vshrl.u32 %v1742, 7
        %v1744 = vsub.s32 2, %v1743
        %v1745 = vrot.slane %v1725, %v1744
        %v1746 = vlaneseq
        %v1747 = vshrl.u32 %v1746, 7
        %v1748 = vsub.s32 2, %v1747
        %v1749 = vrot.slane %v1729, %v1748
        %v1750 = vmul.f32 %v1606, %v1737
        %v1751 = vmul.f32 %v1613, %v1741
        %v1752 = vmul.f32 %v1620, %v1745
        %v1753 = vmul.f32 %v1627, %v1749
        %v1754 = vmul.f32 %v1634, %v1737
        %v1755 = vmul.f32 %v1641, %v1741
        %v1756 = vmul.f32 %v1648, %v1745
        %v1757 = vmul.f32 %v1655, %v1749
        %v1758 = vmul.f32 %v1662, %v1737
        %v1759 = vmul.f32 %v1669, %v1741
        %v1760 = vmul.f32 %v1676, %v1745
        %v1761 = vmul.f32 %v1683, %v1749
        %v1762 = vmul.f32 %v1690, %v1737
        %v1763 = vmul.f32 %v1697, %v1741
        %v1764 = vmul.f32 %v1704, %v1745
        %v1765 = vmul.f32 %v1711, %v1749
        %v1766 = vadd.f32 %v974, %v1750
        %v1767 = vadd.f32 %v975, %v1751
        %v1768 = vadd.f32 %v976, %v1752
        %v1769 = vadd.f32 %v977, %v1753
        %v1770 = vadd.f32 %v978, %v1754
        %v1771 = vadd.f32 %v979, %v1755
        %v1772 = vadd.f32 %v980, %v1756
        %v1773 = vadd.f32 %v981, %v1757
        %v1774 = vadd.f32 %v982, %v1758
        %v1775 = vadd.f32 %v983, %v1759
        %v1776 = vadd.f32 %v984, %v1760
        %v1777 = vadd.f32 %v985, %v1761
        %v1778 = vadd.f32 %v986, %v1762
        %v1779 = vadd.f32 %v987, %v1763
        %v1780 = vadd.f32 %v988, %v1764
        %v1781 = vadd.f32 %v989, %v1765
        %v1782 = vmax.f32 %v1766, 0.0
        %v1783 = vmax.f32 %v1767, 0.0
        %v1784 = vmax.f32 %v1768, 0.0
        %v1785 = vmax.f32 %v1769, 0.0
        %v1786 = vmax.f32 %v1770, 0.0
        %v1787 = vmax.f32 %v1771, 0.0
        %v1788 = vmax.f32 %v1772, 0.0
        %v1789 = vmax.f32 %v1773, 0.0
        %v1790 = vmax.f32 %v1774, 0.0
        %v1791 = vmax.f32 %v1775, 0.0
        %v1792 = vmax.f32 %v1776, 0.0
        %v1793 = vmax.f32 %v1777, 0.0
        %v1794 = vmax.f32 %v1778, 0.0
        %v1795 = vmax.f32 %v1779, 0.0
        %v1796 = vmax.f32 %v1780, 0.0
        %v1797 = vmax.f32 %v1781, 0.0
        %v1798 = vmin.f32 %v1782, 1.0
        %v1799 = vmin.f32 %v1783, 1.0
        %v1800 = vmin.f32 %v1784, 1.0
        %v1801 = vmin.f32 %v1785, 1.0
        %v1802 = vmin.f32 %v1786, 1.0
        %v1803 = vmin.f32 %v1787, 1.0
        %v1804 = vmin.f32 %v1788, 1.0
        %v1805 = vmin.f32 %v1789, 1.0
        %v1806 = vmin.f32 %v1790, 1.0
        %v1807 = vmin.f32 %v1791, 1.0
        %v1808 = vmin.f32 %v1792, 1.0
        %v1809 = vmin.f32 %v1793, 1.0
        %v1810 = vmin.f32 %v1794, 1.0
        %v1811 = vmin.f32 %v1795, 1.0
        %v1812 = vmin.f32 %v1796, 1.0
        %v1813 = vmin.f32 %v1797, 1.0
        %v1830 = vcombine.low %v1798, %v1799
        %v1831 = vcombine.low %v1800, %v1801
        %v1832 = vcombine.low %v1802, %v1803
        %v1833 = vcombine.low %v1804, %v1805
        %v1834 = vcombine.low %v1806, %v1807
        %v1835 = vcombine.low %v1808, %v1809
        %v1836 = vcombine.low %v1810, %v1811
        %v1837 = vcombine.low %v1812, %v1813
        %v1838 = vrot.slane %v1832, 7
        %vm1839 = vcmask 1041409
        %v1840 = vsel %vm1839, %v1838, %v1830
        %vm1841 = vcmask 1045509
        %v1842 = vsel %vm1841, %v1838, %v1840
        %v1843 = vrot.slane %v1834, 6
        %vm1844 = vcmask 1042434
        %v1845 = vsel %vm1844, %v1843, %v1842
        %vm1846 = vcmask 1046534
        %v1847 = vsel %vm1846, %v1843, %v1845
        %v1848 = vrot.slane %v1836, 5
        %vm1849 = vcmask 1043459
        %v1850 = vsel %vm1849, %v1848, %v1847
        %vm1851 = vcmask 1047559
        %v1852 = vsel %vm1851, %v1848, %v1850
        %v1853 = vrot.slane %v1833, 7
        %v1854 = vsel %vm1839, %v1853, %v1831
        %v1855 = vsel %vm1841, %v1853, %v1854
        %v1856 = vrot.slane %v1835, 6
        %v1857 = vsel %vm1844, %v1856, %v1855
        %v1858 = vsel %vm1846, %v1856, %v1857
        %v1859 = vrot.slane %v1837, 5
        %v1860 = vsel %vm1849, %v1859, %v1858
        %v1861 = vsel %vm1851, %v1859, %v1860
        %1864 = vst [vmem:[%s176] sm:$0xff] %v1852
        %1865 = vst [vmem:[%s176 + $0x8] sm:$0xff] %v1861
        %s1866 = sand.u32 %s92, 1
        %s1867 = scalar_lea.sflag [#allocation3], %s1866
        %s1868 = sand.u32 %s92, 1
        %s1869 = smul.addr %s1868, 16
        %s1870 = scalar_lea.vmem [#allocation2], %s1869
        // Predicated region
        $region29: #{tpu_custom_call.1} parent=27 // pred_check
          %p1871 = pneg %p102
        $region30: #{tpu_custom_call.1} parent=27 // pred_check_branch
          %1873 = sbr.rel (%p1871) target = $region32
        $region31: #{tpu_custom_call.1} parent=27 // pred_region
          %s1874 = smul.u32 4, %s21
          %s1876 = ssub.s32 256, 256
          %1877 = vsyncadd %s1867, %s1876
          %s1878 = smul.addr %s20, 4
          %s1879 = sadd.s32 %s1874, %s1878
          %s1880 = smul.addr %s1879, 64
          %s1881 = scalar_lea.hbm %s2, %s1880
          %s1883 = sshll.u32 %s1870, 4
          %s1884 = int_to_ptr.vmem [resolvable:$true] %s1883
          %1886 = dma.vmem_to_hbm [thread:$0]  %s1884, 256, %s1881, %s1867
        $region32: #{tpu_custom_call.1} parent=27 // pred_fallthru
          _
      $region28: #{tpu_custom_call.1} parent=5 // pred_fallthru
        _
      %p1887 = scmp.le.s32.totalorder 2, %s11
      // Predicated region
      $region33: #{tpu_custom_call.1} parent=5 // pred_check
        %p1888 = pneg %p1887
      $region34: #{tpu_custom_call.1} parent=5 // pred_check_branch
        %1890 = sbr.rel (%p1888) target = $region36
      $region35: #{tpu_custom_call.1} parent=5 // pred_region
        %s1891 = ssub.s32 %s11, 2
        // Predicated region
        $region37: #{tpu_custom_call.1} parent=35 // pred_check
          %p1892 = pneg %p108
        $region38: #{tpu_custom_call.1} parent=35 // pred_check_branch
          %1894 = sbr.rel (%p1892) target = $region40
        $region39: #{tpu_custom_call.1} parent=35 // pred_region
          %s1895 = sand.u32 %s93, 1
          %s1896 = scalar_lea.sflag [#allocation3], %s1895
          %s1897 = sand.u32 %s93, 1
          %s1898 = smul.addr %s1897, 16
          %s1899 = scalar_lea.vmem [#allocation2], %s1898
          %1900 = dma.done %s1896, 256
        $region40: #{tpu_custom_call.1} parent=35 // pred_fallthru
          _
      $region36: #{tpu_custom_call.1} parent=5 // pred_fallthru
        _
    $region6: #{tpu_custom_call.1} parent=1 // loop_footer
      %s15 = sadd.s32 1, %s11
    $region7: #{tpu_custom_call.1} parent=1 // loop_footer_branch
      %10 = sbr.rel target = $region3
    $region8: #{tpu_custom_call.1} parent=1 // loop_exit
      _
    %1901 = vsyncpa [#allocation3], 1
    %s1902 = scalar_lea.sflag [#allocation3], 1
    %1903 = vsyncpa %s1902, 1

</llo_original>
